<compile_context>
chip_gen: v5e
topology: v5e:2x2
jax: 0.10.0
libtpu: 0.0.40
codegen_flags: <defaults>
</compile_context>

<pallas_src>
import functools

import jax
import jax.numpy as jnp
from jax.experimental import pallas as pl
from jax.experimental.pallas import tpu as pltpu

EPS = 1e-6  # torch LayerNorm in this module adds eps to the *std* (not var)


def _layernorm(x, a, b):
    # Matches torch: x.std(-1) uses Bessel correction (n-1); eps added to std.
    n = x.shape[-1]
    mean = jnp.mean(x, axis=-1, keepdims=True)
    var = jnp.sum((x - mean) ** 2, axis=-1, keepdims=True) / (n - 1)
    inv = pl.reciprocal(jnp.sqrt(var) + EPS, approx=False)
    return a * (x - mean) * inv + b


def encoder_stack_kernel(x_ref, wqkv_ref, wagg_ref, bagg_ref,
                         ln1a_ref, ln1b_ref, w1_ref, b1_ref, w2_ref, b2_ref,
                         ln2a_ref, ln2b_ref, flna_ref, flnb_ref, o_ref,
                         *, n_heads):
    """Full encoder stack (all layers + final LN) for the whole batch."""
    B, S, D = x_ref.shape
    N = B * S
    L = wagg_ref.shape[0]
    df = D // n_heads

    # Fold batch into the M dimension for all token-level matmuls.
    x = x_ref[...].reshape(N, D)                  # (B*S, D)

    for l in range(L):                            # static unroll (L=2)
        # ---- multi-head attention: single packed QKV matmul ----
        # 1/sqrt(d_model) is pre-folded into the Q columns of wqkv.
        qkv = jnp.dot(x, wqkv_ref[l], preferred_element_type=jnp.float32)  # (N, 3D)

        heads = []
        for i in range(n_heads):                  # static head loop (h=4)
            qi = qkv[:, 0 * D + i * df: 0 * D + (i + 1) * df].reshape(B, S, df)
            ki = qkv[:, 1 * D + i * df: 1 * D + (i + 1) * df].reshape(B, S, df)
            vi = qkv[:, 2 * D + i * df: 2 * D + (i + 1) * df].reshape(B, S, df)
            # Batched over B in one contraction (softmax per (b, head) row).
            s = jnp.einsum('bsd,btd->bst', qi, ki,
                           preferred_element_type=jnp.float32)
            s = s - jnp.max(s, axis=-1, keepdims=True)
            p = jnp.exp(s)
            p = p * pl.reciprocal(jnp.sum(p, axis=-1, keepdims=True),
                                  approx=False)
            heads.append(jnp.einsum('bst,btd->bsd', p, vi,
                                    preferred_element_type=jnp.float32))

        # Lane-concat heads + single (N,D)@(D,D) aggregation matmul.
        att = jnp.concatenate(heads, axis=-1).reshape(N, D)
        att = jnp.dot(att, wagg_ref[l], preferred_element_type=jnp.float32)
        att = att + bagg_ref[l]                   # (1, D) broadcasts

        # ---- residual connection 1 (dropout = identity in eval) ----
        h1 = _layernorm(x + att, ln1a_ref[l], ln1b_ref[l])

        # ---- feed forward (dropout = identity in eval) ----
        f = jnp.dot(h1, w1_ref[l], preferred_element_type=jnp.float32) + b1_ref[l]
        f = jnp.maximum(f, 0.0)
        f = jnp.dot(f, w2_ref[l], preferred_element_type=jnp.float32) + b2_ref[l]

        # ---- residual connection 2 ----
        x = _layernorm(h1 + f, ln2a_ref[l], ln2b_ref[l])

    # ---- final LayerNorm (fused; no extra pallas_call) ----
    o_ref[...] = _layernorm(x, flna_ref[...], flnb_ref[...]).reshape(B, S, D)


def encoder_forward(x, n_heads, weights):
    """Single fused pallas_call for the entire encoder stack (no grid)."""
    B, S, D = x.shape
    kernel = functools.partial(encoder_stack_kernel, n_heads=n_heads)
    return pl.pallas_call(
        kernel,
        out_shape=jax.ShapeDtypeStruct((B, S, D), x.dtype),
        # No grid: every input/output is a full-array VMEM block; single DMA
        # per weight stack, single output store.
        compiler_params=pltpu.CompilerParams(vmem_limit_bytes=32 * 1024 * 1024),
    )(x, *weights)


def init_params(key, d_model, dff, h, encoder_count):
    """Deterministic synthetic weights in math (x @ W) layout, matching the
    torch module's parameter set (per-head q/k/v concatenated column-wise)."""
    L = encoder_count
    keys = jax.random.split(key, 10)

    def rnd(k, shape, s=0.05):
        return jax.random.normal(k, shape, jnp.float32) * s

    return {
        "n_heads": h,
        "wq": rnd(keys[0], (L, d_model, d_model)),
        "wk": rnd(keys[1], (L, d_model, d_model)),
        "wv": rnd(keys[2], (L, d_model, d_model)),
        "wagg": rnd(keys[3], (L, d_model, d_model)),
        "bagg": rnd(keys[4], (L, 1, d_model)),
        "ln1_a": jnp.ones((L, 1, d_model), jnp.float32),
        "ln1_b": jnp.zeros((L, 1, d_model), jnp.float32),
        "w1": rnd(keys[5], (L, d_model, dff)),
        "b1": rnd(keys[6], (L, 1, dff)),
        "w2": rnd(keys[7], (L, dff, d_model)),
        "b2": rnd(keys[8], (L, 1, d_model)),
        "ln2_a": jnp.ones((L, 1, d_model), jnp.float32),
        "ln2_b": jnp.zeros((L, 1, d_model), jnp.float32),
        "fln_a": jnp.ones((1, d_model), jnp.float32),
        "fln_b": jnp.zeros((1, d_model), jnp.float32),
    }


def pack_params(params, d_model):
    """One-time weight transform for the kernel: pack Q|K|V into (L, D, 3D)
    and fold the 1/sqrt(d_model) attention scale into the Q columns."""
    scale = 1.0 / (d_model ** 0.5)
    wqkv = jnp.concatenate(
        [params["wq"] * scale, params["wk"], params["wv"]], axis=-1)  # (L, D, 3D)
    return [wqkv, params["wagg"], params["bagg"],
            params["ln1_a"], params["ln1_b"],
            params["w1"], params["b1"], params["w2"], params["b2"],
            params["ln2_a"], params["ln2_b"],
            params["fln_a"], params["fln_b"]]


def encoder_ref(x, params):
    """Pure-JAX reference mirroring the torch forward (eval mode)."""
    def ln(y, a, b):
        n = y.shape[-1]
        mean = jnp.mean(y, -1, keepdims=True)
        var = jnp.sum((y - mean) ** 2, -1, keepdims=True) / (n - 1)
        return a * (y - mean) / (jnp.sqrt(var) + EPS) + b

    D = x.shape[-1]
    h = params["n_heads"]
    df = D // h
    L = params["wagg"].shape[0]
    for l in range(L):
        heads = []
        for i in range(h):
            q = x @ params["wq"][l][:, i * df:(i + 1) * df]
            k = x @ params["wk"][l][:, i * df:(i + 1) * df]
            v = x @ params["wv"][l][:, i * df:(i + 1) * df]
            s = q @ jnp.swapaxes(k, -2, -1) / (D ** 0.5)
            s = jax.nn.softmax(s, -1)
            heads.append(s @ v)
        att = jnp.concatenate(heads, -1) @ params["wagg"][l] + params["bagg"][l]
        h1 = ln(x + att, params["ln1_a"][l], params["ln1_b"][l])
        f = (jax.nn.relu(h1 @ params["w1"][l] + params["b1"][l])
             @ params["w2"][l] + params["b2"][l])
        x = ln(h1 + f, params["ln2_a"][l], params["ln2_b"][l])
    return ln(x, params["fln_a"], params["fln_b"])


if __name__ == "__main__":
    B, S, d_model, dff, h, encoder_count = 2, 8, 32, 64, 4, 2
    key = jax.random.PRNGKey(0)
    kx, kp = jax.random.split(key)
    x = jax.random.normal(kx, (B, S, d_model), jnp.float32)
    params = init_params(kp, d_model, dff, h, encoder_count)
    weights = pack_params(params, d_model)          # one-time weight transform

    out = encoder_forward(x, h, weights)
    jax.block_until_ready(out)

    ref = encoder_ref(x, params)
    assert out.shape == (B, S, d_model)
    max_err = float(jnp.max(jnp.abs(out - ref)))
    assert jnp.allclose(out, ref, rtol=1e-4, atol=1e-4), max_err
    print("KERNEL_OK")
</pallas_src>

<mosaic_0001>
module attributes {stable_mosaic.version = 11 : i64} {
  func.func @encoder_stack_kernel(%arg0: memref<2x8x32xf32, #tpu.memory_space<vmem>>, %arg1: memref<2x32x96xf32, #tpu.memory_space<vmem>>, %arg2: memref<2x32x32xf32, #tpu.memory_space<vmem>>, %arg3: memref<2x1x32xf32, #tpu.memory_space<vmem>>, %arg4: memref<2x1x32xf32, #tpu.memory_space<vmem>>, %arg5: memref<2x1x32xf32, #tpu.memory_space<vmem>>, %arg6: memref<2x32x64xf32, #tpu.memory_space<vmem>>, %arg7: memref<2x1x64xf32, #tpu.memory_space<vmem>>, %arg8: memref<2x64x32xf32, #tpu.memory_space<vmem>>, %arg9: memref<2x1x32xf32, #tpu.memory_space<vmem>>, %arg10: memref<2x1x32xf32, #tpu.memory_space<vmem>>, %arg11: memref<2x1x32xf32, #tpu.memory_space<vmem>>, %arg12: memref<1x32xf32, #tpu.memory_space<vmem>>, %arg13: memref<1x32xf32, #tpu.memory_space<vmem>>, %arg14: memref<2x8x32xf32, #tpu.memory_space<vmem>>) attributes {dimension_semantics = [], scalar_prefetch = 0 : i64, scratch_operands = 0 : i64, tpu.core_type = #tpu.core_type<tc>} {
    %c0 = arith.constant 0 : index
    %c0_0 = arith.constant 0 : index
    %c0_1 = arith.constant 0 : index
    %0 = vector.load %arg0[%c0, %c0_0, %c0_1] : memref<2x8x32xf32, #tpu.memory_space<vmem>>, vector<2x8x32xf32>
    %1 = vector.shape_cast %0 : vector<2x8x32xf32> to vector<16x32xf32>
    %c0_2 = arith.constant 0 : index
    %c0_3 = arith.constant 0 : index
    %c0_4 = arith.constant 0 : index
    %2 = vector.load %arg1[%c0_2, %c0_3, %c0_4] : memref<2x32x96xf32, #tpu.memory_space<vmem>>, vector<1x32x96xf32>
    %3 = vector.shape_cast %2 : vector<1x32x96xf32> to vector<32x96xf32>
    %cst = arith.constant dense<0.000000e+00> : vector<16x96xf32>
    %4 = tpu.matmul %1, %3, %cst {dimension_numbers = #tpu.dot_dimension_numbers<[1], [0], [0], [1], [0, 0, 1, 1], [], []>} : vector<16x32xf32>, vector<32x96xf32>, vector<16x96xf32> -> vector<16x96xf32>
    %5 = vector.extract_strided_slice %4 {offsets = [0, 0], sizes = [16, 8], strides = [1, 1]} : vector<16x96xf32> to vector<16x8xf32>
    %6 = vector.shape_cast %5 : vector<16x8xf32> to vector<2x8x8xf32>
    %7 = vector.extract_strided_slice %4 {offsets = [0, 32], sizes = [16, 8], strides = [1, 1]} : vector<16x96xf32> to vector<16x8xf32>
    %8 = vector.shape_cast %7 : vector<16x8xf32> to vector<2x8x8xf32>
    %9 = vector.extract_strided_slice %4 {offsets = [0, 64], sizes = [16, 8], strides = [1, 1]} : vector<16x96xf32> to vector<16x8xf32>
    %10 = vector.shape_cast %9 : vector<16x8xf32> to vector<2x8x8xf32>
    "tpu.trace_start"() <{level = 10 : i32, message = "bsd,btd->bst"}> : () -> ()
    %cst_5 = arith.constant dense<0.000000e+00> : vector<2x8x8xf32>
    %11 = tpu.matmul %6, %8, %cst_5 {dimension_numbers = #tpu.dot_dimension_numbers<[2], [2], [1], [1], [0, 0, 0, 1, 1, 1], [0], [0]>} : vector<2x8x8xf32>, vector<2x8x8xf32>, vector<2x8x8xf32> -> vector<2x8x8xf32>
    "tpu.trace_stop"() : () -> ()
    %cst_6 = arith.constant dense<0xFF800000> : vector<2x8xf32>
    %12 = vector.multi_reduction <maximumf>, %11, %cst_6 [2] : vector<2x8x8xf32> to vector<2x8xf32>
    %13 = vector.shape_cast %12 : vector<2x8xf32> to vector<2x8x1xf32>
    %14 = vector.broadcast %13 : vector<2x8x1xf32> to vector<2x8x8xf32>
    %15 = arith.subf %11, %14 : vector<2x8x8xf32>
    %16 = math.exp %15 : vector<2x8x8xf32>
    %cst_7 = arith.constant dense<0.000000e+00> : vector<2x8xf32>
    %17 = vector.multi_reduction <add>, %16, %cst_7 [2] : vector<2x8x8xf32> to vector<2x8xf32>
    %18 = vector.shape_cast %17 : vector<2x8xf32> to vector<2x8x1xf32>
    %19 = tpu.reciprocal %18 : vector<2x8x1xf32> -> vector<2x8x1xf32>
    %20 = vector.broadcast %19 : vector<2x8x1xf32> to vector<2x8x8xf32>
    %21 = arith.mulf %16, %20 : vector<2x8x8xf32>
    "tpu.trace_start"() <{level = 10 : i32, message = "bst,btd->bsd"}> : () -> ()
    %cst_8 = arith.constant dense<0.000000e+00> : vector<2x8x8xf32>
    %22 = tpu.matmul %21, %10, %cst_8 {dimension_numbers = #tpu.dot_dimension_numbers<[2], [1], [1], [2], [0, 0, 0, 1, 1, 2], [0], [0]>} : vector<2x8x8xf32>, vector<2x8x8xf32>, vector<2x8x8xf32> -> vector<2x8x8xf32>
    "tpu.trace_stop"() : () -> ()
    %23 = vector.extract_strided_slice %4 {offsets = [0, 8], sizes = [16, 8], strides = [1, 1]} : vector<16x96xf32> to vector<16x8xf32>
    %24 = vector.shape_cast %23 : vector<16x8xf32> to vector<2x8x8xf32>
    %25 = vector.extract_strided_slice %4 {offsets = [0, 40], sizes = [16, 8], strides = [1, 1]} : vector<16x96xf32> to vector<16x8xf32>
    %26 = vector.shape_cast %25 : vector<16x8xf32> to vector<2x8x8xf32>
    %27 = vector.extract_strided_slice %4 {offsets = [0, 72], sizes = [16, 8], strides = [1, 1]} : vector<16x96xf32> to vector<16x8xf32>
    %28 = vector.shape_cast %27 : vector<16x8xf32> to vector<2x8x8xf32>
    "tpu.trace_start"() <{level = 10 : i32, message = "bsd,btd->bst"}> : () -> ()
    %cst_9 = arith.constant dense<0.000000e+00> : vector<2x8x8xf32>
    %29 = tpu.matmul %24, %26, %cst_9 {dimension_numbers = #tpu.dot_dimension_numbers<[2], [2], [1], [1], [0, 0, 0, 1, 1, 1], [0], [0]>} : vector<2x8x8xf32>, vector<2x8x8xf32>, vector<2x8x8xf32> -> vector<2x8x8xf32>
    "tpu.trace_stop"() : () -> ()
    %cst_10 = arith.constant dense<0xFF800000> : vector<2x8xf32>
    %30 = vector.multi_reduction <maximumf>, %29, %cst_10 [2] : vector<2x8x8xf32> to vector<2x8xf32>
    %31 = vector.shape_cast %30 : vector<2x8xf32> to vector<2x8x1xf32>
    %32 = vector.broadcast %31 : vector<2x8x1xf32> to vector<2x8x8xf32>
    %33 = arith.subf %29, %32 : vector<2x8x8xf32>
    %34 = math.exp %33 : vector<2x8x8xf32>
    %cst_11 = arith.constant dense<0.000000e+00> : vector<2x8xf32>
    %35 = vector.multi_reduction <add>, %34, %cst_11 [2] : vector<2x8x8xf32> to vector<2x8xf32>
    %36 = vector.shape_cast %35 : vector<2x8xf32> to vector<2x8x1xf32>
    %37 = tpu.reciprocal %36 : vector<2x8x1xf32> -> vector<2x8x1xf32>
    %38 = vector.broadcast %37 : vector<2x8x1xf32> to vector<2x8x8xf32>
    %39 = arith.mulf %34, %38 : vector<2x8x8xf32>
    "tpu.trace_start"() <{level = 10 : i32, message = "bst,btd->bsd"}> : () -> ()
    %cst_12 = arith.constant dense<0.000000e+00> : vector<2x8x8xf32>
    %40 = tpu.matmul %39, %28, %cst_12 {dimension_numbers = #tpu.dot_dimension_numbers<[2], [1], [1], [2], [0, 0, 0, 1, 1, 2], [0], [0]>} : vector<2x8x8xf32>, vector<2x8x8xf32>, vector<2x8x8xf32> -> vector<2x8x8xf32>
    "tpu.trace_stop"() : () -> ()
    %41 = vector.extract_strided_slice %4 {offsets = [0, 16], sizes = [16, 8], strides = [1, 1]} : vector<16x96xf32> to vector<16x8xf32>
    %42 = vector.shape_cast %41 : vector<16x8xf32> to vector<2x8x8xf32>
    %43 = vector.extract_strided_slice %4 {offsets = [0, 48], sizes = [16, 8], strides = [1, 1]} : vector<16x96xf32> to vector<16x8xf32>
    %44 = vector.shape_cast %43 : vector<16x8xf32> to vector<2x8x8xf32>
    %45 = vector.extract_strided_slice %4 {offsets = [0, 80], sizes = [16, 8], strides = [1, 1]} : vector<16x96xf32> to vector<16x8xf32>
    %46 = vector.shape_cast %45 : vector<16x8xf32> to vector<2x8x8xf32>
    "tpu.trace_start"() <{level = 10 : i32, message = "bsd,btd->bst"}> : () -> ()
    %cst_13 = arith.constant dense<0.000000e+00> : vector<2x8x8xf32>
    %47 = tpu.matmul %42, %44, %cst_13 {dimension_numbers = #tpu.dot_dimension_numbers<[2], [2], [1], [1], [0, 0, 0, 1, 1, 1], [0], [0]>} : vector<2x8x8xf32>, vector<2x8x8xf32>, vector<2x8x8xf32> -> vector<2x8x8xf32>
    "tpu.trace_stop"() : () -> ()
    %cst_14 = arith.constant dense<0xFF800000> : vector<2x8xf32>
    %48 = vector.multi_reduction <maximumf>, %47, %cst_14 [2] : vector<2x8x8xf32> to vector<2x8xf32>
    %49 = vector.shape_cast %48 : vector<2x8xf32> to vector<2x8x1xf32>
    %50 = vector.broadcast %49 : vector<2x8x1xf32> to vector<2x8x8xf32>
    %51 = arith.subf %47, %50 : vector<2x8x8xf32>
    %52 = math.exp %51 : vector<2x8x8xf32>
    %cst_15 = arith.constant dense<0.000000e+00> : vector<2x8xf32>
    %53 = vector.multi_reduction <add>, %52, %cst_15 [2] : vector<2x8x8xf32> to vector<2x8xf32>
    %54 = vector.shape_cast %53 : vector<2x8xf32> to vector<2x8x1xf32>
    %55 = tpu.reciprocal %54 : vector<2x8x1xf32> -> vector<2x8x1xf32>
    %56 = vector.broadcast %55 : vector<2x8x1xf32> to vector<2x8x8xf32>
    %57 = arith.mulf %52, %56 : vector<2x8x8xf32>
    "tpu.trace_start"() <{level = 10 : i32, message = "bst,btd->bsd"}> : () -> ()
    %cst_16 = arith.constant dense<0.000000e+00> : vector<2x8x8xf32>
    %58 = tpu.matmul %57, %46, %cst_16 {dimension_numbers = #tpu.dot_dimension_numbers<[2], [1], [1], [2], [0, 0, 0, 1, 1, 2], [0], [0]>} : vector<2x8x8xf32>, vector<2x8x8xf32>, vector<2x8x8xf32> -> vector<2x8x8xf32>
    "tpu.trace_stop"() : () -> ()
    %59 = vector.extract_strided_slice %4 {offsets = [0, 24], sizes = [16, 8], strides = [1, 1]} : vector<16x96xf32> to vector<16x8xf32>
    %60 = vector.shape_cast %59 : vector<16x8xf32> to vector<2x8x8xf32>
    %61 = vector.extract_strided_slice %4 {offsets = [0, 56], sizes = [16, 8], strides = [1, 1]} : vector<16x96xf32> to vector<16x8xf32>
    %62 = vector.shape_cast %61 : vector<16x8xf32> to vector<2x8x8xf32>
    %63 = vector.extract_strided_slice %4 {offsets = [0, 88], sizes = [16, 8], strides = [1, 1]} : vector<16x96xf32> to vector<16x8xf32>
    %64 = vector.shape_cast %63 : vector<16x8xf32> to vector<2x8x8xf32>
    "tpu.trace_start"() <{level = 10 : i32, message = "bsd,btd->bst"}> : () -> ()
    %cst_17 = arith.constant dense<0.000000e+00> : vector<2x8x8xf32>
    %65 = tpu.matmul %60, %62, %cst_17 {dimension_numbers = #tpu.dot_dimension_numbers<[2], [2], [1], [1], [0, 0, 0, 1, 1, 1], [0], [0]>} : vector<2x8x8xf32>, vector<2x8x8xf32>, vector<2x8x8xf32> -> vector<2x8x8xf32>
    "tpu.trace_stop"() : () -> ()
    %cst_18 = arith.constant dense<0xFF800000> : vector<2x8xf32>
    %66 = vector.multi_reduction <maximumf>, %65, %cst_18 [2] : vector<2x8x8xf32> to vector<2x8xf32>
    %67 = vector.shape_cast %66 : vector<2x8xf32> to vector<2x8x1xf32>
    %68 = vector.broadcast %67 : vector<2x8x1xf32> to vector<2x8x8xf32>
    %69 = arith.subf %65, %68 : vector<2x8x8xf32>
    %70 = math.exp %69 : vector<2x8x8xf32>
    %cst_19 = arith.constant dense<0.000000e+00> : vector<2x8xf32>
    %71 = vector.multi_reduction <add>, %70, %cst_19 [2] : vector<2x8x8xf32> to vector<2x8xf32>
    %72 = vector.shape_cast %71 : vector<2x8xf32> to vector<2x8x1xf32>
    %73 = tpu.reciprocal %72 : vector<2x8x1xf32> -> vector<2x8x1xf32>
    %74 = vector.broadcast %73 : vector<2x8x1xf32> to vector<2x8x8xf32>
    %75 = arith.mulf %70, %74 : vector<2x8x8xf32>
    "tpu.trace_start"() <{level = 10 : i32, message = "bst,btd->bsd"}> : () -> ()
    %cst_20 = arith.constant dense<0.000000e+00> : vector<2x8x8xf32>
    %76 = tpu.matmul %75, %64, %cst_20 {dimension_numbers = #tpu.dot_dimension_numbers<[2], [1], [1], [2], [0, 0, 0, 1, 1, 2], [0], [0]>} : vector<2x8x8xf32>, vector<2x8x8xf32>, vector<2x8x8xf32> -> vector<2x8x8xf32>
    "tpu.trace_stop"() : () -> ()
    %77 = tpu.concatenate %22, %40, %58, %76 in 2 : vector<2x8x8xf32>, vector<2x8x8xf32>, vector<2x8x8xf32>, vector<2x8x8xf32> -> vector<2x8x32xf32>
    %78 = vector.shape_cast %77 : vector<2x8x32xf32> to vector<16x32xf32>
    %c0_21 = arith.constant 0 : index
    %c0_22 = arith.constant 0 : index
    %c0_23 = arith.constant 0 : index
    %79 = vector.load %arg2[%c0_21, %c0_22, %c0_23] : memref<2x32x32xf32, #tpu.memory_space<vmem>>, vector<1x32x32xf32>
    %80 = vector.shape_cast %79 : vector<1x32x32xf32> to vector<32x32xf32>
    %cst_24 = arith.constant dense<0.000000e+00> : vector<16x32xf32>
    %81 = tpu.matmul %78, %80, %cst_24 {dimension_numbers = #tpu.dot_dimension_numbers<[1], [0], [0], [1], [0, 0, 1, 1], [], []>} : vector<16x32xf32>, vector<32x32xf32>, vector<16x32xf32> -> vector<16x32xf32>
    %c0_25 = arith.constant 0 : index
    %c0_26 = arith.constant 0 : index
    %c0_27 = arith.constant 0 : index
    %82 = vector.load %arg3[%c0_25, %c0_26, %c0_27] : memref<2x1x32xf32, #tpu.memory_space<vmem>>, vector<1x1x32xf32>
    %83 = vector.shape_cast %82 : vector<1x1x32xf32> to vector<1x32xf32>
    %84 = vector.broadcast %83 : vector<1x32xf32> to vector<16x32xf32>
    %85 = arith.addf %81, %84 : vector<16x32xf32>
    %86 = arith.addf %1, %85 : vector<16x32xf32>
    %c0_28 = arith.constant 0 : index
    %c0_29 = arith.constant 0 : index
    %c0_30 = arith.constant 0 : index
    %87 = vector.load %arg4[%c0_28, %c0_29, %c0_30] : memref<2x1x32xf32, #tpu.memory_space<vmem>>, vector<1x1x32xf32>
    %88 = vector.shape_cast %87 : vector<1x1x32xf32> to vector<1x32xf32>
    %c0_31 = arith.constant 0 : index
    %c0_32 = arith.constant 0 : index
    %c0_33 = arith.constant 0 : index
    %89 = vector.load %arg5[%c0_31, %c0_32, %c0_33] : memref<2x1x32xf32, #tpu.memory_space<vmem>>, vector<1x1x32xf32>
    %90 = vector.shape_cast %89 : vector<1x1x32xf32> to vector<1x32xf32>
    %cst_34 = arith.constant dense<0.000000e+00> : vector<16xf32>
    %91 = vector.multi_reduction <add>, %86, %cst_34 [1] : vector<16x32xf32> to vector<16xf32>
    %92 = vector.shape_cast %91 : vector<16xf32> to vector<16x1xf32>
    %cst_35 = arith.constant 3.200000e+01 : f32
    %93 = vector.broadcast %cst_35 : f32 to vector<16x1xf32>
    %94 = arith.divf %92, %93 : vector<16x1xf32>
    %95 = vector.broadcast %94 : vector<16x1xf32> to vector<16x32xf32>
    %96 = arith.subf %86, %95 : vector<16x32xf32>
    %97 = arith.mulf %96, %96 : vector<16x32xf32>
    %cst_36 = arith.constant dense<0.000000e+00> : vector<16xf32>
    %98 = vector.multi_reduction <add>, %97, %cst_36 [1] : vector<16x32xf32> to vector<16xf32>
    %99 = vector.shape_cast %98 : vector<16xf32> to vector<16x1xf32>
    %cst_37 = arith.constant 3.100000e+01 : f32
    %100 = vector.broadcast %cst_37 : f32 to vector<16x1xf32>
    %101 = arith.divf %99, %100 : vector<16x1xf32>
    %102 = math.sqrt %101 : vector<16x1xf32>
    %cst_38 = arith.constant 9.99999997E-7 : f32
    %103 = vector.broadcast %cst_38 : f32 to vector<16x1xf32>
    %104 = arith.addf %102, %103 : vector<16x1xf32>
    %105 = tpu.reciprocal %104 : vector<16x1xf32> -> vector<16x1xf32>
    %106 = vector.broadcast %94 : vector<16x1xf32> to vector<16x32xf32>
    %107 = arith.subf %86, %106 : vector<16x32xf32>
    %108 = vector.broadcast %88 : vector<1x32xf32> to vector<16x32xf32>
    %109 = arith.mulf %108, %107 : vector<16x32xf32>
    %110 = vector.broadcast %105 : vector<16x1xf32> to vector<16x32xf32>
    %111 = arith.mulf %109, %110 : vector<16x32xf32>
    %112 = vector.broadcast %90 : vector<1x32xf32> to vector<16x32xf32>
    %113 = arith.addf %111, %112 : vector<16x32xf32>
    %c0_39 = arith.constant 0 : index
    %c0_40 = arith.constant 0 : index
    %c0_41 = arith.constant 0 : index
    %114 = vector.load %arg6[%c0_39, %c0_40, %c0_41] : memref<2x32x64xf32, #tpu.memory_space<vmem>>, vector<1x32x64xf32>
    %115 = vector.shape_cast %114 : vector<1x32x64xf32> to vector<32x64xf32>
    %cst_42 = arith.constant dense<0.000000e+00> : vector<16x64xf32>
    %116 = tpu.matmul %113, %115, %cst_42 {dimension_numbers = #tpu.dot_dimension_numbers<[1], [0], [0], [1], [0, 0, 1, 1], [], []>} : vector<16x32xf32>, vector<32x64xf32>, vector<16x64xf32> -> vector<16x64xf32>
    %c0_43 = arith.constant 0 : index
    %c0_44 = arith.constant 0 : index
    %c0_45 = arith.constant 0 : index
    %117 = vector.load %arg7[%c0_43, %c0_44, %c0_45] : memref<2x1x64xf32, #tpu.memory_space<vmem>>, vector<1x1x64xf32>
    %118 = vector.shape_cast %117 : vector<1x1x64xf32> to vector<1x64xf32>
    %119 = vector.broadcast %118 : vector<1x64xf32> to vector<16x64xf32>
    %120 = arith.addf %116, %119 : vector<16x64xf32>
    %cst_46 = arith.constant 0.000000e+00 : f32
    %121 = vector.broadcast %cst_46 : f32 to vector<16x64xf32>
    %122 = arith.maximumf %120, %121 : vector<16x64xf32>
    %c0_47 = arith.constant 0 : index
    %c0_48 = arith.constant 0 : index
    %c0_49 = arith.constant 0 : index
    %123 = vector.load %arg8[%c0_47, %c0_48, %c0_49] : memref<2x64x32xf32, #tpu.memory_space<vmem>>, vector<1x64x32xf32>
    %124 = vector.shape_cast %123 : vector<1x64x32xf32> to vector<64x32xf32>
    %cst_50 = arith.constant dense<0.000000e+00> : vector<16x32xf32>
    %125 = tpu.matmul %122, %124, %cst_50 {dimension_numbers = #tpu.dot_dimension_numbers<[1], [0], [0], [1], [0, 0, 1, 1], [], []>} : vector<16x64xf32>, vector<64x32xf32>, vector<16x32xf32> -> vector<16x32xf32>
    %c0_51 = arith.constant 0 : index
    %c0_52 = arith.constant 0 : index
    %c0_53 = arith.constant 0 : index
    %126 = vector.load %arg9[%c0_51, %c0_52, %c0_53] : memref<2x1x32xf32, #tpu.memory_space<vmem>>, vector<1x1x32xf32>
    %127 = vector.shape_cast %126 : vector<1x1x32xf32> to vector<1x32xf32>
    %128 = vector.broadcast %127 : vector<1x32xf32> to vector<16x32xf32>
    %129 = arith.addf %125, %128 : vector<16x32xf32>
    %130 = arith.addf %113, %129 : vector<16x32xf32>
    %c0_54 = arith.constant 0 : index
    %c0_55 = arith.constant 0 : index
    %c0_56 = arith.constant 0 : index
    %131 = vector.load %arg10[%c0_54, %c0_55, %c0_56] : memref<2x1x32xf32, #tpu.memory_space<vmem>>, vector<1x1x32xf32>
    %132 = vector.shape_cast %131 : vector<1x1x32xf32> to vector<1x32xf32>
    %c0_57 = arith.constant 0 : index
    %c0_58 = arith.constant 0 : index
    %c0_59 = arith.constant 0 : index
    %133 = vector.load %arg11[%c0_57, %c0_58, %c0_59] : memref<2x1x32xf32, #tpu.memory_space<vmem>>, vector<1x1x32xf32>
    %134 = vector.shape_cast %133 : vector<1x1x32xf32> to vector<1x32xf32>
    %cst_60 = arith.constant dense<0.000000e+00> : vector<16xf32>
    %135 = vector.multi_reduction <add>, %130, %cst_60 [1] : vector<16x32xf32> to vector<16xf32>
    %136 = vector.shape_cast %135 : vector<16xf32> to vector<16x1xf32>
    %cst_61 = arith.constant 3.200000e+01 : f32
    %137 = vector.broadcast %cst_61 : f32 to vector<16x1xf32>
    %138 = arith.divf %136, %137 : vector<16x1xf32>
    %139 = vector.broadcast %138 : vector<16x1xf32> to vector<16x32xf32>
    %140 = arith.subf %130, %139 : vector<16x32xf32>
    %141 = arith.mulf %140, %140 : vector<16x32xf32>
    %cst_62 = arith.constant dense<0.000000e+00> : vector<16xf32>
    %142 = vector.multi_reduction <add>, %141, %cst_62 [1] : vector<16x32xf32> to vector<16xf32>
    %143 = vector.shape_cast %142 : vector<16xf32> to vector<16x1xf32>
    %cst_63 = arith.constant 3.100000e+01 : f32
    %144 = vector.broadcast %cst_63 : f32 to vector<16x1xf32>
    %145 = arith.divf %143, %144 : vector<16x1xf32>
    %146 = math.sqrt %145 : vector<16x1xf32>
    %cst_64 = arith.constant 9.99999997E-7 : f32
    %147 = vector.broadcast %cst_64 : f32 to vector<16x1xf32>
    %148 = arith.addf %146, %147 : vector<16x1xf32>
    %149 = tpu.reciprocal %148 : vector<16x1xf32> -> vector<16x1xf32>
    %150 = vector.broadcast %138 : vector<16x1xf32> to vector<16x32xf32>
    %151 = arith.subf %130, %150 : vector<16x32xf32>
    %152 = vector.broadcast %132 : vector<1x32xf32> to vector<16x32xf32>
    %153 = arith.mulf %152, %151 : vector<16x32xf32>
    %154 = vector.broadcast %149 : vector<16x1xf32> to vector<16x32xf32>
    %155 = arith.mulf %153, %154 : vector<16x32xf32>
    %156 = vector.broadcast %134 : vector<1x32xf32> to vector<16x32xf32>
    %157 = arith.addf %155, %156 : vector<16x32xf32>
    %c1 = arith.constant 1 : index
    %c0_65 = arith.constant 0 : index
    %c0_66 = arith.constant 0 : index
    %158 = vector.load %arg1[%c1, %c0_65, %c0_66] : memref<2x32x96xf32, #tpu.memory_space<vmem>>, vector<1x32x96xf32>
    %159 = vector.shape_cast %158 : vector<1x32x96xf32> to vector<32x96xf32>
    %cst_67 = arith.constant dense<0.000000e+00> : vector<16x96xf32>
    %160 = tpu.matmul %157, %159, %cst_67 {dimension_numbers = #tpu.dot_dimension_numbers<[1], [0], [0], [1], [0, 0, 1, 1], [], []>} : vector<16x32xf32>, vector<32x96xf32>, vector<16x96xf32> -> vector<16x96xf32>
    %161 = vector.extract_strided_slice %160 {offsets = [0, 0], sizes = [16, 8], strides = [1, 1]} : vector<16x96xf32> to vector<16x8xf32>
    %162 = vector.shape_cast %161 : vector<16x8xf32> to vector<2x8x8xf32>
    %163 = vector.extract_strided_slice %160 {offsets = [0, 32], sizes = [16, 8], strides = [1, 1]} : vector<16x96xf32> to vector<16x8xf32>
    %164 = vector.shape_cast %163 : vector<16x8xf32> to vector<2x8x8xf32>
    %165 = vector.extract_strided_slice %160 {offsets = [0, 64], sizes = [16, 8], strides = [1, 1]} : vector<16x96xf32> to vector<16x8xf32>
    %166 = vector.shape_cast %165 : vector<16x8xf32> to vector<2x8x8xf32>
    "tpu.trace_start"() <{level = 10 : i32, message = "bsd,btd->bst"}> : () -> ()
    %cst_68 = arith.constant dense<0.000000e+00> : vector<2x8x8xf32>
    %167 = tpu.matmul %162, %164, %cst_68 {dimension_numbers = #tpu.dot_dimension_numbers<[2], [2], [1], [1], [0, 0, 0, 1, 1, 1], [0], [0]>} : vector<2x8x8xf32>, vector<2x8x8xf32>, vector<2x8x8xf32> -> vector<2x8x8xf32>
    "tpu.trace_stop"() : () -> ()
    %cst_69 = arith.constant dense<0xFF800000> : vector<2x8xf32>
    %168 = vector.multi_reduction <maximumf>, %167, %cst_69 [2] : vector<2x8x8xf32> to vector<2x8xf32>
    %169 = vector.shape_cast %168 : vector<2x8xf32> to vector<2x8x1xf32>
    %170 = vector.broadcast %169 : vector<2x8x1xf32> to vector<2x8x8xf32>
    %171 = arith.subf %167, %170 : vector<2x8x8xf32>
    %172 = math.exp %171 : vector<2x8x8xf32>
    %cst_70 = arith.constant dense<0.000000e+00> : vector<2x8xf32>
    %173 = vector.multi_reduction <add>, %172, %cst_70 [2] : vector<2x8x8xf32> to vector<2x8xf32>
    %174 = vector.shape_cast %173 : vector<2x8xf32> to vector<2x8x1xf32>
    %175 = tpu.reciprocal %174 : vector<2x8x1xf32> -> vector<2x8x1xf32>
    %176 = vector.broadcast %175 : vector<2x8x1xf32> to vector<2x8x8xf32>
    %177 = arith.mulf %172, %176 : vector<2x8x8xf32>
    "tpu.trace_start"() <{level = 10 : i32, message = "bst,btd->bsd"}> : () -> ()
    %cst_71 = arith.constant dense<0.000000e+00> : vector<2x8x8xf32>
    %178 = tpu.matmul %177, %166, %cst_71 {dimension_numbers = #tpu.dot_dimension_numbers<[2], [1], [1], [2], [0, 0, 0, 1, 1, 2], [0], [0]>} : vector<2x8x8xf32>, vector<2x8x8xf32>, vector<2x8x8xf32> -> vector<2x8x8xf32>
    "tpu.trace_stop"() : () -> ()
    %179 = vector.extract_strided_slice %160 {offsets = [0, 8], sizes = [16, 8], strides = [1, 1]} : vector<16x96xf32> to vector<16x8xf32>
    %180 = vector.shape_cast %179 : vector<16x8xf32> to vector<2x8x8xf32>
    %181 = vector.extract_strided_slice %160 {offsets = [0, 40], sizes = [16, 8], strides = [1, 1]} : vector<16x96xf32> to vector<16x8xf32>
    %182 = vector.shape_cast %181 : vector<16x8xf32> to vector<2x8x8xf32>
    %183 = vector.extract_strided_slice %160 {offsets = [0, 72], sizes = [16, 8], strides = [1, 1]} : vector<16x96xf32> to vector<16x8xf32>
    %184 = vector.shape_cast %183 : vector<16x8xf32> to vector<2x8x8xf32>
    "tpu.trace_start"() <{level = 10 : i32, message = "bsd,btd->bst"}> : () -> ()
    %cst_72 = arith.constant dense<0.000000e+00> : vector<2x8x8xf32>
    %185 = tpu.matmul %180, %182, %cst_72 {dimension_numbers = #tpu.dot_dimension_numbers<[2], [2], [1], [1], [0, 0, 0, 1, 1, 1], [0], [0]>} : vector<2x8x8xf32>, vector<2x8x8xf32>, vector<2x8x8xf32> -> vector<2x8x8xf32>
    "tpu.trace_stop"() : () -> ()
    %cst_73 = arith.constant dense<0xFF800000> : vector<2x8xf32>
    %186 = vector.multi_reduction <maximumf>, %185, %cst_73 [2] : vector<2x8x8xf32> to vector<2x8xf32>
    %187 = vector.shape_cast %186 : vector<2x8xf32> to vector<2x8x1xf32>
    %188 = vector.broadcast %187 : vector<2x8x1xf32> to vector<2x8x8xf32>
    %189 = arith.subf %185, %188 : vector<2x8x8xf32>
    %190 = math.exp %189 : vector<2x8x8xf32>
    %cst_74 = arith.constant dense<0.000000e+00> : vector<2x8xf32>
    %191 = vector.multi_reduction <add>, %190, %cst_74 [2] : vector<2x8x8xf32> to vector<2x8xf32>
    %192 = vector.shape_cast %191 : vector<2x8xf32> to vector<2x8x1xf32>
    %193 = tpu.reciprocal %192 : vector<2x8x1xf32> -> vector<2x8x1xf32>
    %194 = vector.broadcast %193 : vector<2x8x1xf32> to vector<2x8x8xf32>
    %195 = arith.mulf %190, %194 : vector<2x8x8xf32>
    "tpu.trace_start"() <{level = 10 : i32, message = "bst,btd->bsd"}> : () -> ()
    %cst_75 = arith.constant dense<0.000000e+00> : vector<2x8x8xf32>
    %196 = tpu.matmul %195, %184, %cst_75 {dimension_numbers = #tpu.dot_dimension_numbers<[2], [1], [1], [2], [0, 0, 0, 1, 1, 2], [0], [0]>} : vector<2x8x8xf32>, vector<2x8x8xf32>, vector<2x8x8xf32> -> vector<2x8x8xf32>
    "tpu.trace_stop"() : () -> ()
    %197 = vector.extract_strided_slice %160 {offsets = [0, 16], sizes = [16, 8], strides = [1, 1]} : vector<16x96xf32> to vector<16x8xf32>
    %198 = vector.shape_cast %197 : vector<16x8xf32> to vector<2x8x8xf32>
    %199 = vector.extract_strided_slice %160 {offsets = [0, 48], sizes = [16, 8], strides = [1, 1]} : vector<16x96xf32> to vector<16x8xf32>
    %200 = vector.shape_cast %199 : vector<16x8xf32> to vector<2x8x8xf32>
    %201 = vector.extract_strided_slice %160 {offsets = [0, 80], sizes = [16, 8], strides = [1, 1]} : vector<16x96xf32> to vector<16x8xf32>
    %202 = vector.shape_cast %201 : vector<16x8xf32> to vector<2x8x8xf32>
    "tpu.trace_start"() <{level = 10 : i32, message = "bsd,btd->bst"}> : () -> ()
    %cst_76 = arith.constant dense<0.000000e+00> : vector<2x8x8xf32>
    %203 = tpu.matmul %198, %200, %cst_76 {dimension_numbers = #tpu.dot_dimension_numbers<[2], [2], [1], [1], [0, 0, 0, 1, 1, 1], [0], [0]>} : vector<2x8x8xf32>, vector<2x8x8xf32>, vector<2x8x8xf32> -> vector<2x8x8xf32>
    "tpu.trace_stop"() : () -> ()
    %cst_77 = arith.constant dense<0xFF800000> : vector<2x8xf32>
    %204 = vector.multi_reduction <maximumf>, %203, %cst_77 [2] : vector<2x8x8xf32> to vector<2x8xf32>
    %205 = vector.shape_cast %204 : vector<2x8xf32> to vector<2x8x1xf32>
    %206 = vector.broadcast %205 : vector<2x8x1xf32> to vector<2x8x8xf32>
    %207 = arith.subf %203, %206 : vector<2x8x8xf32>
    %208 = math.exp %207 : vector<2x8x8xf32>
    %cst_78 = arith.constant dense<0.000000e+00> : vector<2x8xf32>
    %209 = vector.multi_reduction <add>, %208, %cst_78 [2] : vector<2x8x8xf32> to vector<2x8xf32>
    %210 = vector.shape_cast %209 : vector<2x8xf32> to vector<2x8x1xf32>
    %211 = tpu.reciprocal %210 : vector<2x8x1xf32> -> vector<2x8x1xf32>
    %212 = vector.broadcast %211 : vector<2x8x1xf32> to vector<2x8x8xf32>
    %213 = arith.mulf %208, %212 : vector<2x8x8xf32>
    "tpu.trace_start"() <{level = 10 : i32, message = "bst,btd->bsd"}> : () -> ()
    %cst_79 = arith.constant dense<0.000000e+00> : vector<2x8x8xf32>
    %214 = tpu.matmul %213, %202, %cst_79 {dimension_numbers = #tpu.dot_dimension_numbers<[2], [1], [1], [2], [0, 0, 0, 1, 1, 2], [0], [0]>} : vector<2x8x8xf32>, vector<2x8x8xf32>, vector<2x8x8xf32> -> vector<2x8x8xf32>
    "tpu.trace_stop"() : () -> ()
    %215 = vector.extract_strided_slice %160 {offsets = [0, 24], sizes = [16, 8], strides = [1, 1]} : vector<16x96xf32> to vector<16x8xf32>
    %216 = vector.shape_cast %215 : vector<16x8xf32> to vector<2x8x8xf32>
    %217 = vector.extract_strided_slice %160 {offsets = [0, 56], sizes = [16, 8], strides = [1, 1]} : vector<16x96xf32> to vector<16x8xf32>
    %218 = vector.shape_cast %217 : vector<16x8xf32> to vector<2x8x8xf32>
    %219 = vector.extract_strided_slice %160 {offsets = [0, 88], sizes = [16, 8], strides = [1, 1]} : vector<16x96xf32> to vector<16x8xf32>
    %220 = vector.shape_cast %219 : vector<16x8xf32> to vector<2x8x8xf32>
    "tpu.trace_start"() <{level = 10 : i32, message = "bsd,btd->bst"}> : () -> ()
    %cst_80 = arith.constant dense<0.000000e+00> : vector<2x8x8xf32>
    %221 = tpu.matmul %216, %218, %cst_80 {dimension_numbers = #tpu.dot_dimension_numbers<[2], [2], [1], [1], [0, 0, 0, 1, 1, 1], [0], [0]>} : vector<2x8x8xf32>, vector<2x8x8xf32>, vector<2x8x8xf32> -> vector<2x8x8xf32>
    "tpu.trace_stop"() : () -> ()
    %cst_81 = arith.constant dense<0xFF800000> : vector<2x8xf32>
    %222 = vector.multi_reduction <maximumf>, %221, %cst_81 [2] : vector<2x8x8xf32> to vector<2x8xf32>
    %223 = vector.shape_cast %222 : vector<2x8xf32> to vector<2x8x1xf32>
    %224 = vector.broadcast %223 : vector<2x8x1xf32> to vector<2x8x8xf32>
    %225 = arith.subf %221, %224 : vector<2x8x8xf32>
    %226 = math.exp %225 : vector<2x8x8xf32>
    %cst_82 = arith.constant dense<0.000000e+00> : vector<2x8xf32>
    %227 = vector.multi_reduction <add>, %226, %cst_82 [2] : vector<2x8x8xf32> to vector<2x8xf32>
    %228 = vector.shape_cast %227 : vector<2x8xf32> to vector<2x8x1xf32>
    %229 = tpu.reciprocal %228 : vector<2x8x1xf32> -> vector<2x8x1xf32>
    %230 = vector.broadcast %229 : vector<2x8x1xf32> to vector<2x8x8xf32>
    %231 = arith.mulf %226, %230 : vector<2x8x8xf32>
    "tpu.trace_start"() <{level = 10 : i32, message = "bst,btd->bsd"}> : () -> ()
    %cst_83 = arith.constant dense<0.000000e+00> : vector<2x8x8xf32>
    %232 = tpu.matmul %231, %220, %cst_83 {dimension_numbers = #tpu.dot_dimension_numbers<[2], [1], [1], [2], [0, 0, 0, 1, 1, 2], [0], [0]>} : vector<2x8x8xf32>, vector<2x8x8xf32>, vector<2x8x8xf32> -> vector<2x8x8xf32>
    "tpu.trace_stop"() : () -> ()
    %233 = tpu.concatenate %178, %196, %214, %232 in 2 : vector<2x8x8xf32>, vector<2x8x8xf32>, vector<2x8x8xf32>, vector<2x8x8xf32> -> vector<2x8x32xf32>
    %234 = vector.shape_cast %233 : vector<2x8x32xf32> to vector<16x32xf32>
    %c1_84 = arith.constant 1 : index
    %c0_85 = arith.constant 0 : index
    %c0_86 = arith.constant 0 : index
    %235 = vector.load %arg2[%c1_84, %c0_85, %c0_86] : memref<2x32x32xf32, #tpu.memory_space<vmem>>, vector<1x32x32xf32>
    %236 = vector.shape_cast %235 : vector<1x32x32xf32> to vector<32x32xf32>
    %cst_87 = arith.constant dense<0.000000e+00> : vector<16x32xf32>
    %237 = tpu.matmul %234, %236, %cst_87 {dimension_numbers = #tpu.dot_dimension_numbers<[1], [0], [0], [1], [0, 0, 1, 1], [], []>} : vector<16x32xf32>, vector<32x32xf32>, vector<16x32xf32> -> vector<16x32xf32>
    %c1_88 = arith.constant 1 : index
    %c0_89 = arith.constant 0 : index
    %c0_90 = arith.constant 0 : index
    %238 = vector.load %arg3[%c1_88, %c0_89, %c0_90] : memref<2x1x32xf32, #tpu.memory_space<vmem>>, vector<1x1x32xf32>
    %239 = vector.shape_cast %238 : vector<1x1x32xf32> to vector<1x32xf32>
    %240 = vector.broadcast %239 : vector<1x32xf32> to vector<16x32xf32>
    %241 = arith.addf %237, %240 : vector<16x32xf32>
    %242 = arith.addf %157, %241 : vector<16x32xf32>
    %c1_91 = arith.constant 1 : index
    %c0_92 = arith.constant 0 : index
    %c0_93 = arith.constant 0 : index
    %243 = vector.load %arg4[%c1_91, %c0_92, %c0_93] : memref<2x1x32xf32, #tpu.memory_space<vmem>>, vector<1x1x32xf32>
    %244 = vector.shape_cast %243 : vector<1x1x32xf32> to vector<1x32xf32>
    %c1_94 = arith.constant 1 : index
    %c0_95 = arith.constant 0 : index
    %c0_96 = arith.constant 0 : index
    %245 = vector.load %arg5[%c1_94, %c0_95, %c0_96] : memref<2x1x32xf32, #tpu.memory_space<vmem>>, vector<1x1x32xf32>
    %246 = vector.shape_cast %245 : vector<1x1x32xf32> to vector<1x32xf32>
    %cst_97 = arith.constant dense<0.000000e+00> : vector<16xf32>
    %247 = vector.multi_reduction <add>, %242, %cst_97 [1] : vector<16x32xf32> to vector<16xf32>
    %248 = vector.shape_cast %247 : vector<16xf32> to vector<16x1xf32>
    %cst_98 = arith.constant 3.200000e+01 : f32
    %249 = vector.broadcast %cst_98 : f32 to vector<16x1xf32>
    %250 = arith.divf %248, %249 : vector<16x1xf32>
    %251 = vector.broadcast %250 : vector<16x1xf32> to vector<16x32xf32>
    %252 = arith.subf %242, %251 : vector<16x32xf32>
    %253 = arith.mulf %252, %252 : vector<16x32xf32>
    %cst_99 = arith.constant dense<0.000000e+00> : vector<16xf32>
    %254 = vector.multi_reduction <add>, %253, %cst_99 [1] : vector<16x32xf32> to vector<16xf32>
    %255 = vector.shape_cast %254 : vector<16xf32> to vector<16x1xf32>
    %cst_100 = arith.constant 3.100000e+01 : f32
    %256 = vector.broadcast %cst_100 : f32 to vector<16x1xf32>
    %257 = arith.divf %255, %256 : vector<16x1xf32>
    %258 = math.sqrt %257 : vector<16x1xf32>
    %cst_101 = arith.constant 9.99999997E-7 : f32
    %259 = vector.broadcast %cst_101 : f32 to vector<16x1xf32>
    %260 = arith.addf %258, %259 : vector<16x1xf32>
    %261 = tpu.reciprocal %260 : vector<16x1xf32> -> vector<16x1xf32>
    %262 = vector.broadcast %250 : vector<16x1xf32> to vector<16x32xf32>
    %263 = arith.subf %242, %262 : vector<16x32xf32>
    %264 = vector.broadcast %244 : vector<1x32xf32> to vector<16x32xf32>
    %265 = arith.mulf %264, %263 : vector<16x32xf32>
    %266 = vector.broadcast %261 : vector<16x1xf32> to vector<16x32xf32>
    %267 = arith.mulf %265, %266 : vector<16x32xf32>
    %268 = vector.broadcast %246 : vector<1x32xf32> to vector<16x32xf32>
    %269 = arith.addf %267, %268 : vector<16x32xf32>
    %c1_102 = arith.constant 1 : index
    %c0_103 = arith.constant 0 : index
    %c0_104 = arith.constant 0 : index
    %270 = vector.load %arg6[%c1_102, %c0_103, %c0_104] : memref<2x32x64xf32, #tpu.memory_space<vmem>>, vector<1x32x64xf32>
    %271 = vector.shape_cast %270 : vector<1x32x64xf32> to vector<32x64xf32>
    %cst_105 = arith.constant dense<0.000000e+00> : vector<16x64xf32>
    %272 = tpu.matmul %269, %271, %cst_105 {dimension_numbers = #tpu.dot_dimension_numbers<[1], [0], [0], [1], [0, 0, 1, 1], [], []>} : vector<16x32xf32>, vector<32x64xf32>, vector<16x64xf32> -> vector<16x64xf32>
    %c1_106 = arith.constant 1 : index
    %c0_107 = arith.constant 0 : index
    %c0_108 = arith.constant 0 : index
    %273 = vector.load %arg7[%c1_106, %c0_107, %c0_108] : memref<2x1x64xf32, #tpu.memory_space<vmem>>, vector<1x1x64xf32>
    %274 = vector.shape_cast %273 : vector<1x1x64xf32> to vector<1x64xf32>
    %275 = vector.broadcast %274 : vector<1x64xf32> to vector<16x64xf32>
    %276 = arith.addf %272, %275 : vector<16x64xf32>
    %cst_109 = arith.constant 0.000000e+00 : f32
    %277 = vector.broadcast %cst_109 : f32 to vector<16x64xf32>
    %278 = arith.maximumf %276, %277 : vector<16x64xf32>
    %c1_110 = arith.constant 1 : index
    %c0_111 = arith.constant 0 : index
    %c0_112 = arith.constant 0 : index
    %279 = vector.load %arg8[%c1_110, %c0_111, %c0_112] : memref<2x64x32xf32, #tpu.memory_space<vmem>>, vector<1x64x32xf32>
    %280 = vector.shape_cast %279 : vector<1x64x32xf32> to vector<64x32xf32>
    %cst_113 = arith.constant dense<0.000000e+00> : vector<16x32xf32>
    %281 = tpu.matmul %278, %280, %cst_113 {dimension_numbers = #tpu.dot_dimension_numbers<[1], [0], [0], [1], [0, 0, 1, 1], [], []>} : vector<16x64xf32>, vector<64x32xf32>, vector<16x32xf32> -> vector<16x32xf32>
    %c1_114 = arith.constant 1 : index
    %c0_115 = arith.constant 0 : index
    %c0_116 = arith.constant 0 : index
    %282 = vector.load %arg9[%c1_114, %c0_115, %c0_116] : memref<2x1x32xf32, #tpu.memory_space<vmem>>, vector<1x1x32xf32>
    %283 = vector.shape_cast %282 : vector<1x1x32xf32> to vector<1x32xf32>
    %284 = vector.broadcast %283 : vector<1x32xf32> to vector<16x32xf32>
    %285 = arith.addf %281, %284 : vector<16x32xf32>
    %286 = arith.addf %269, %285 : vector<16x32xf32>
    %c1_117 = arith.constant 1 : index
    %c0_118 = arith.constant 0 : index
    %c0_119 = arith.constant 0 : index
    %287 = vector.load %arg10[%c1_117, %c0_118, %c0_119] : memref<2x1x32xf32, #tpu.memory_space<vmem>>, vector<1x1x32xf32>
    %288 = vector.shape_cast %287 : vector<1x1x32xf32> to vector<1x32xf32>
    %c1_120 = arith.constant 1 : index
    %c0_121 = arith.constant 0 : index
    %c0_122 = arith.constant 0 : index
    %289 = vector.load %arg11[%c1_120, %c0_121, %c0_122] : memref<2x1x32xf32, #tpu.memory_space<vmem>>, vector<1x1x32xf32>
    %290 = vector.shape_cast %289 : vector<1x1x32xf32> to vector<1x32xf32>
    %cst_123 = arith.constant dense<0.000000e+00> : vector<16xf32>
    %291 = vector.multi_reduction <add>, %286, %cst_123 [1] : vector<16x32xf32> to vector<16xf32>
    %292 = vector.shape_cast %291 : vector<16xf32> to vector<16x1xf32>
    %cst_124 = arith.constant 3.200000e+01 : f32
    %293 = vector.broadcast %cst_124 : f32 to vector<16x1xf32>
    %294 = arith.divf %292, %293 : vector<16x1xf32>
    %295 = vector.broadcast %294 : vector<16x1xf32> to vector<16x32xf32>
    %296 = arith.subf %286, %295 : vector<16x32xf32>
    %297 = arith.mulf %296, %296 : vector<16x32xf32>
    %cst_125 = arith.constant dense<0.000000e+00> : vector<16xf32>
    %298 = vector.multi_reduction <add>, %297, %cst_125 [1] : vector<16x32xf32> to vector<16xf32>
    %299 = vector.shape_cast %298 : vector<16xf32> to vector<16x1xf32>
    %cst_126 = arith.constant 3.100000e+01 : f32
    %300 = vector.broadcast %cst_126 : f32 to vector<16x1xf32>
    %301 = arith.divf %299, %300 : vector<16x1xf32>
    %302 = math.sqrt %301 : vector<16x1xf32>
    %cst_127 = arith.constant 9.99999997E-7 : f32
    %303 = vector.broadcast %cst_127 : f32 to vector<16x1xf32>
    %304 = arith.addf %302, %303 : vector<16x1xf32>
    %305 = tpu.reciprocal %304 : vector<16x1xf32> -> vector<16x1xf32>
    %306 = vector.broadcast %294 : vector<16x1xf32> to vector<16x32xf32>
    %307 = arith.subf %286, %306 : vector<16x32xf32>
    %308 = vector.broadcast %288 : vector<1x32xf32> to vector<16x32xf32>
    %309 = arith.mulf %308, %307 : vector<16x32xf32>
    %310 = vector.broadcast %305 : vector<16x1xf32> to vector<16x32xf32>
    %311 = arith.mulf %309, %310 : vector<16x32xf32>
    %312 = vector.broadcast %290 : vector<1x32xf32> to vector<16x32xf32>
    %313 = arith.addf %311, %312 : vector<16x32xf32>
    %c0_128 = arith.constant 0 : index
    %c0_129 = arith.constant 0 : index
    %314 = vector.load %arg12[%c0_128, %c0_129] : memref<1x32xf32, #tpu.memory_space<vmem>>, vector<1x32xf32>
    %c0_130 = arith.constant 0 : index
    %c0_131 = arith.constant 0 : index
    %315 = vector.load %arg13[%c0_130, %c0_131] : memref<1x32xf32, #tpu.memory_space<vmem>>, vector<1x32xf32>
    %cst_132 = arith.constant dense<0.000000e+00> : vector<16xf32>
    %316 = vector.multi_reduction <add>, %313, %cst_132 [1] : vector<16x32xf32> to vector<16xf32>
    %317 = vector.shape_cast %316 : vector<16xf32> to vector<16x1xf32>
    %cst_133 = arith.constant 3.200000e+01 : f32
    %318 = vector.broadcast %cst_133 : f32 to vector<16x1xf32>
    %319 = arith.divf %317, %318 : vector<16x1xf32>
    %320 = vector.broadcast %319 : vector<16x1xf32> to vector<16x32xf32>
    %321 = arith.subf %313, %320 : vector<16x32xf32>
    %322 = arith.mulf %321, %321 : vector<16x32xf32>
    %cst_134 = arith.constant dense<0.000000e+00> : vector<16xf32>
    %323 = vector.multi_reduction <add>, %322, %cst_134 [1] : vector<16x32xf32> to vector<16xf32>
    %324 = vector.shape_cast %323 : vector<16xf32> to vector<16x1xf32>
    %cst_135 = arith.constant 3.100000e+01 : f32
    %325 = vector.broadcast %cst_135 : f32 to vector<16x1xf32>
    %326 = arith.divf %324, %325 : vector<16x1xf32>
    %327 = math.sqrt %326 : vector<16x1xf32>
    %cst_136 = arith.constant 9.99999997E-7 : f32
    %328 = vector.broadcast %cst_136 : f32 to vector<16x1xf32>
    %329 = arith.addf %327, %328 : vector<16x1xf32>
    %330 = tpu.reciprocal %329 : vector<16x1xf32> -> vector<16x1xf32>
    %331 = vector.broadcast %319 : vector<16x1xf32> to vector<16x32xf32>
    %332 = arith.subf %313, %331 : vector<16x32xf32>
    %333 = vector.broadcast %314 : vector<1x32xf32> to vector<16x32xf32>
    %334 = arith.mulf %333, %332 : vector<16x32xf32>
    %335 = vector.broadcast %330 : vector<16x1xf32> to vector<16x32xf32>
    %336 = arith.mulf %334, %335 : vector<16x32xf32>
    %337 = vector.broadcast %315 : vector<1x32xf32> to vector<16x32xf32>
    %338 = arith.addf %336, %337 : vector<16x32xf32>
    %339 = vector.shape_cast %338 : vector<16x32xf32> to vector<2x8x32xf32>
    %c0_137 = arith.constant 0 : index
    %c0_138 = arith.constant 0 : index
    %c0_139 = arith.constant 0 : index
    %340 = vector.load %arg14[%c0_137, %c0_138, %c0_139] : memref<2x8x32xf32, #tpu.memory_space<vmem>>, vector<2x8x32xf32>
    tpu.vector_store %arg14[%c0_137, %c0_138, %c0_139], %339 {strides = array<i32>} : memref<2x8x32xf32, #tpu.memory_space<vmem>>, vector<2x8x32xf32>,
    return
  }
}

</mosaic_0001>

<llo_original>
// kernel: tpu_custom_call.1
$region0: #{tpu_custom_call.1}
  #allocation0 [shape = 'u32[]', space=smem, size = 0x4, offset = 0x4, fixed_abs, tag = 'smem constant byte address 0x4 - core index']
  #allocation1 [shape = 'u32[72,128]{1,0:T(1,128)}', space=vmem, size = 0x9000, scoped, tag = 'internal scratch']
  %s0 = inlined_call_operand.hbm [shape: f32[2,8,32], index: 0, kind: input, shape index: {}]
  %s1 = inlined_call_operand.vmem [shape: f32[2,32,96], index: 1, kind: input, shape index: {}]
  %s2 = inlined_call_operand.vmem [shape: f32[2,32,32], index: 2, kind: input, shape index: {}]
  %s3 = inlined_call_operand.vmem [shape: f32[2,1,32], index: 3, kind: input, shape index: {}]
  %s4 = inlined_call_operand.hbm [shape: f32[2,1,32], index: 4, kind: input, shape index: {}]
  %s5 = inlined_call_operand.hbm [shape: f32[2,1,32], index: 5, kind: input, shape index: {}]
  %s6 = inlined_call_operand.vmem [shape: f32[2,32,64], index: 6, kind: input, shape index: {}]
  %s7 = inlined_call_operand.vmem [shape: f32[2,1,64], index: 7, kind: input, shape index: {}]
  %s8 = inlined_call_operand.vmem [shape: f32[2,64,32], index: 8, kind: input, shape index: {}]
  %s9 = inlined_call_operand.vmem [shape: f32[2,1,32], index: 9, kind: input, shape index: {}]
  %s10 = inlined_call_operand.vmem [shape: f32[2,1,32], index: 10, kind: input, shape index: {}]
  %s11 = inlined_call_operand.hbm [shape: f32[2,1,32], index: 11, kind: input, shape index: {}]
  %s12 = inlined_call_operand.vmem [shape: f32[1,32], index: 12, kind: input, shape index: {}]
  %s13 = inlined_call_operand.vmem [shape: f32[1,32], index: 13, kind: input, shape index: {}]
  %s14 = inlined_call_operand.hbm [shape: f32[2,8,32], index: 14, kind: output, shape index: {}]
  %s15 = sld [smem:[#allocation0]]
  $region82: #{tpu_custom_call.1} parent=0
    _
  %s17 = ssub.s32 1, %s15
  %s18 = scalar_select 0, %s17, %s15
  $region1: #{tpu_custom_call.1} parent=0
    #allocation2 [shape = 'u8[8192]{0}', space=vmem, size = 0x2000, scoped, tag = 'input window, operand 0, single buffered']
    #allocation3 [shape = 's32[1]{0}', space=sflag, size = 0x4, scoped, tag = 'scoped memory for tpu_custom_call.1']
    #allocation4 [shape = 's32[1]{0}', space=sflag, size = 0x4, scoped, tag = 'scoped memory for tpu_custom_call.1']
    #allocation5 [shape = 'u8[1024]{0}', space=vmem, size = 0x400, scoped, tag = 'input window, operand 4, single buffered']
    #allocation6 [shape = 's32[1]{0}', space=sflag, size = 0x4, scoped, tag = 'scoped memory for tpu_custom_call.1']
    #allocation7 [shape = 'u8[1024]{0}', space=vmem, size = 0x400, scoped, tag = 'input window, operand 5, single buffered']
    #allocation8 [shape = 'u8[1024]{0}', space=vmem, size = 0x400, scoped, tag = 'input window, operand 11, single buffered']
    #allocation9 [shape = 's32[1]{0}', space=sflag, size = 0x4, scoped, tag = 'scoped memory for tpu_custom_call.1']
    #allocation10 [shape = 'u8[8192]{0}', space=vmem, size = 0x2000, scoped, tag = 'output window, operand 0, single buffered']
    %19 = vsyncpa [#allocation3], 0
    %20 = vsyncpa [#allocation6], 0
    %21 = vsyncpa [#allocation9], 0
    %22 = vsyncpa [#allocation4], 0
    // Predicated region
    $region2: #{tpu_custom_call.1} parent=1 // pred_check
      _
    $region3: #{tpu_custom_call.1} parent=1 // pred_check_branch
      %24 = sbr.rel (0) target = $region5
    $region4: #{tpu_custom_call.1} parent=1 // pred_region
      %26 = vsyncadd [#allocation3], 0
      %s27 = sshll.u32 %s0, 4
      %s28 = int_to_ptr.hbm [resolvable:$true] %s27
      %s29 = sshll.u32 [#allocation2], 4
      %s30 = int_to_ptr.vmem [resolvable:$true] %s29
      %35 = dma.hbm_to_vmem [thread:$0]  %s28, 256, %s30, [#allocation3], 128, 128, 8
    $region5: #{tpu_custom_call.1} parent=1 // pred_fallthru
      _
    // Predicated region
    $region6: #{tpu_custom_call.1} parent=1 // pred_check
      _
    $region7: #{tpu_custom_call.1} parent=1 // pred_check_branch
      %37 = sbr.rel (0) target = $region9
    $region8: #{tpu_custom_call.1} parent=1 // pred_region
      _
    $region9: #{tpu_custom_call.1} parent=1 // pred_fallthru
      _
    // Predicated region
    $region10: #{tpu_custom_call.1} parent=1 // pred_check
      _
    $region11: #{tpu_custom_call.1} parent=1 // pred_check_branch
      %39 = sbr.rel (0) target = $region13
    $region12: #{tpu_custom_call.1} parent=1 // pred_region
      _
    $region13: #{tpu_custom_call.1} parent=1 // pred_fallthru
      _
    // Predicated region
    $region14: #{tpu_custom_call.1} parent=1 // pred_check
      _
    $region15: #{tpu_custom_call.1} parent=1 // pred_check_branch
      %41 = sbr.rel (0) target = $region17
    $region16: #{tpu_custom_call.1} parent=1 // pred_region
      _
    $region17: #{tpu_custom_call.1} parent=1 // pred_fallthru
      _
    // Predicated region
    $region18: #{tpu_custom_call.1} parent=1 // pred_check
      _
    $region19: #{tpu_custom_call.1} parent=1 // pred_check_branch
      %43 = sbr.rel (0) target = $region21
    $region20: #{tpu_custom_call.1} parent=1 // pred_region
      %45 = vsyncadd [#allocation6], 0
      %s46 = sshll.u32 %s4, 4
      %s47 = int_to_ptr.hbm [resolvable:$true] %s46
      %s48 = sshll.u32 [#allocation5], 4
      %s49 = int_to_ptr.vmem [resolvable:$true] %s48
      %54 = dma.hbm_to_vmem [thread:$0]  %s47, 32, %s49, [#allocation6], 16, 16, 1
    $region21: #{tpu_custom_call.1} parent=1 // pred_fallthru
      _
    // Predicated region
    $region22: #{tpu_custom_call.1} parent=1 // pred_check
      _
    $region23: #{tpu_custom_call.1} parent=1 // pred_check_branch
      %56 = sbr.rel (0) target = $region25
    $region24: #{tpu_custom_call.1} parent=1 // pred_region
      %58 = vsyncadd [#allocation6], 0
      %s59 = sshll.u32 %s5, 4
      %s60 = int_to_ptr.hbm [resolvable:$true] %s59
      %s61 = sshll.u32 [#allocation7], 4
      %s62 = int_to_ptr.vmem [resolvable:$true] %s61
      %67 = dma.hbm_to_vmem [thread:$0]  %s60, 32, %s62, [#allocation6], 16, 16, 1
    $region25: #{tpu_custom_call.1} parent=1 // pred_fallthru
      _
    // Predicated region
    $region26: #{tpu_custom_call.1} parent=1 // pred_check
      _
    $region27: #{tpu_custom_call.1} parent=1 // pred_check_branch
      %69 = sbr.rel (0) target = $region29
    $region28: #{tpu_custom_call.1} parent=1 // pred_region
      _
    $region29: #{tpu_custom_call.1} parent=1 // pred_fallthru
      _
    // Predicated region
    $region30: #{tpu_custom_call.1} parent=1 // pred_check
      _
    $region31: #{tpu_custom_call.1} parent=1 // pred_check_branch
      %71 = sbr.rel (0) target = $region33
    $region32: #{tpu_custom_call.1} parent=1 // pred_region
      _
    $region33: #{tpu_custom_call.1} parent=1 // pred_fallthru
      _
    // Predicated region
    $region34: #{tpu_custom_call.1} parent=1 // pred_check
      _
    $region35: #{tpu_custom_call.1} parent=1 // pred_check_branch
      %73 = sbr.rel (0) target = $region37
    $region36: #{tpu_custom_call.1} parent=1 // pred_region
      _
    $region37: #{tpu_custom_call.1} parent=1 // pred_fallthru
      _
    // Predicated region
    $region38: #{tpu_custom_call.1} parent=1 // pred_check
      _
    $region39: #{tpu_custom_call.1} parent=1 // pred_check_branch
      %75 = sbr.rel (0) target = $region41
    $region40: #{tpu_custom_call.1} parent=1 // pred_region
      _
    $region41: #{tpu_custom_call.1} parent=1 // pred_fallthru
      _
    // Predicated region
    $region42: #{tpu_custom_call.1} parent=1 // pred_check
      _
    $region43: #{tpu_custom_call.1} parent=1 // pred_check_branch
      %77 = sbr.rel (0) target = $region45
    $region44: #{tpu_custom_call.1} parent=1 // pred_region
      _
    $region45: #{tpu_custom_call.1} parent=1 // pred_fallthru
      _
    // Predicated region
    $region46: #{tpu_custom_call.1} parent=1 // pred_check
      _
    $region47: #{tpu_custom_call.1} parent=1 // pred_check_branch
      %79 = sbr.rel (0) target = $region49
    $region48: #{tpu_custom_call.1} parent=1 // pred_region
      %81 = vsyncadd [#allocation9], 0
      %s82 = sshll.u32 %s11, 4
      %s83 = int_to_ptr.hbm [resolvable:$true] %s82
      %s84 = sshll.u32 [#allocation8], 4
      %s85 = int_to_ptr.vmem [resolvable:$true] %s84
      %90 = dma.hbm_to_vmem [thread:$0]  %s83, 32, %s85, [#allocation9], 16, 16, 1
    $region49: #{tpu_custom_call.1} parent=1 // pred_fallthru
      _
    // Predicated region
    $region50: #{tpu_custom_call.1} parent=1 // pred_check
      _
    $region51: #{tpu_custom_call.1} parent=1 // pred_check_branch
      %92 = sbr.rel (0) target = $region53
    $region52: #{tpu_custom_call.1} parent=1 // pred_region
      _
    $region53: #{tpu_custom_call.1} parent=1 // pred_fallthru
      _
    // Predicated region
    $region54: #{tpu_custom_call.1} parent=1 // pred_check
      _
    $region55: #{tpu_custom_call.1} parent=1 // pred_check_branch
      %94 = sbr.rel (0) target = $region57
    $region56: #{tpu_custom_call.1} parent=1 // pred_region
      _
    $region57: #{tpu_custom_call.1} parent=1 // pred_fallthru
      _
    // Predicated region
    $region58: #{tpu_custom_call.1} parent=1 // pred_check
      _
    $region59: #{tpu_custom_call.1} parent=1 // pred_check_branch
      %96 = sbr.rel (0) target = $region61
    $region60: #{tpu_custom_call.1} parent=1 // pred_region
      %98 = dma.done [#allocation3], 256
    $region61: #{tpu_custom_call.1} parent=1 // pred_fallthru
      _
    // Predicated region
    $region62: #{tpu_custom_call.1} parent=1 // pred_check
      _
    $region63: #{tpu_custom_call.1} parent=1 // pred_check_branch
      %100 = sbr.rel (0) target = $region65
    $region64: #{tpu_custom_call.1} parent=1 // pred_region
      %102 = dma.done [#allocation6], 32
    $region65: #{tpu_custom_call.1} parent=1 // pred_fallthru
      _
    // Predicated region
    $region66: #{tpu_custom_call.1} parent=1 // pred_check
      _
    $region67: #{tpu_custom_call.1} parent=1 // pred_check_branch
      %104 = sbr.rel (0) target = $region69
    $region68: #{tpu_custom_call.1} parent=1 // pred_region
      %106 = dma.done [#allocation6], 32
    $region69: #{tpu_custom_call.1} parent=1 // pred_fallthru
      _
    // Predicated region
    $region70: #{tpu_custom_call.1} parent=1 // pred_check
      _
    $region71: #{tpu_custom_call.1} parent=1 // pred_check_branch
      %108 = sbr.rel (0) target = $region73
    $region72: #{tpu_custom_call.1} parent=1 // pred_region
      %110 = dma.done [#allocation9], 32
    $region73: #{tpu_custom_call.1} parent=1 // pred_fallthru
      _
    %v111 = vld [vmem:[#allocation2] sm:$0xff]
    %v112 = vld [vmem:[#allocation2 + $0x8] sm:$0xff]
    %v113 = vld [vmem:[%s1] sm:$0xff]
    %v114 = vld [vmem:[%s1 + $0x8] sm:$0xff]
    %v115 = vld [vmem:[%s1 + $0x10] sm:$0xff]
    %v116 = vld [vmem:[%s1 + $0x18] sm:$0xff]
    %vm117 = vcmask 261120
    %v119 = vsel %vm117, %v111, 0
    %v122 = vsel %vm117, %v112, 0
    %124 = vmatpush.msra.mxu0 0.0
    %125 = vmatpush.msra.mxu0 0.0
    %126 = vmatpush.msra.mxu0 0.0
    %127 = vmatpush.msra.mxu0 0.0
    %128 = vmatpush.msra.mxu0 0.0
    %129 = vmatpush.msra.mxu0 0.0
    %130 = vmatpush.msra.mxu0 0.0
    %131 = vmatpush.msra.mxu0 0.0
    %132 = vmatpush.msra.mxu0 0.0
    %133 = vmatpush.msra.mxu0 0.0
    %134 = vmatpush.msra.mxu0 0.0
    %135 = vmatpush.msra.mxu0 0.0
    %136 = vmatpush.msra.mxu0 %v116
    %137 = vmatpush.msra.mxu0 %v115
    %138 = vmatpush.msra.mxu0 %v114
    %139 = vmatpush.msra.mxu0 %v113
    %140 = vmatmul.f32.gmra.mxu0 %v119
    %v141 = vpop.f32.mrf.mxu0
    %v142 = vadd.f32 0.0, %v141
    %143 = vmatmul.f32.gmra.mxu0 %v122
    %v144 = vpop.f32.mrf.mxu0
    %v145 = vadd.f32 0.0, %v144
    %146 = vdwg.mxu0
    %148 = vrot.lane.b32.xlu0 %v142, 96
    %v149 = vpop.permute.xlu0 %148
    %vm150 = vcmask 64512
    %v151 = vsel %vm150, %v142, 0
    %v153 = vsel %vm150, %v149, 0
    %155 = vmatpush.xpose.msra.mxu0 0.0
    %156 = vmatpush.xpose.msra.mxu0 0.0
    %157 = vmatpush.xpose.msra.mxu0 0.0
    %158 = vmatpush.xpose.msra.mxu0 0.0
    %159 = vmatpush.xpose.msra.mxu0 0.0
    %160 = vmatpush.xpose.msra.mxu0 0.0
    %161 = vmatpush.xpose.msra.mxu0 0.0
    %162 = vmatpush.xpose.msra.mxu0 0.0
    %163 = vmatpush.xpose.msra.mxu0 0.0
    %164 = vmatpush.xpose.msra.mxu0 0.0
    %165 = vmatpush.xpose.msra.mxu0 0.0
    %166 = vmatpush.xpose.msra.mxu0 0.0
    %167 = vmatpush.xpose.msra.mxu0 0.0
    %168 = vmatpush.xpose.msra.mxu0 0.0
    %169 = vmatpush.xpose.msra.mxu0 0.0
    %170 = vmatpush.xpose.msra.mxu0 %v153
    %171 = vmatmul.f32.gmra.mxu0 %v151
    %v172 = vpop.f32.mrf.mxu0
    %v173 = vadd.f32 0.0, %v172
    %174 = vdwg.mxu0
    %176 = vrot.lane.b32.xlu0 %v145, 96
    %v177 = vpop.permute.xlu0 %176
    %v178 = vsel %vm150, %v145, 0
    %v180 = vsel %vm150, %v177, 0
    %182 = vmatpush.xpose.msra.mxu0 0.0
    %183 = vmatpush.xpose.msra.mxu0 0.0
    %184 = vmatpush.xpose.msra.mxu0 0.0
    %185 = vmatpush.xpose.msra.mxu0 0.0
    %186 = vmatpush.xpose.msra.mxu0 0.0
    %187 = vmatpush.xpose.msra.mxu0 0.0
    %188 = vmatpush.xpose.msra.mxu0 0.0
    %189 = vmatpush.xpose.msra.mxu0 0.0
    %190 = vmatpush.xpose.msra.mxu0 0.0
    %191 = vmatpush.xpose.msra.mxu0 0.0
    %192 = vmatpush.xpose.msra.mxu0 0.0
    %193 = vmatpush.xpose.msra.mxu0 0.0
    %194 = vmatpush.xpose.msra.mxu0 0.0
    %195 = vmatpush.xpose.msra.mxu0 0.0
    %196 = vmatpush.xpose.msra.mxu0 0.0
    %197 = vmatpush.xpose.msra.mxu0 %v180
    %198 = vmatmul.f32.gmra.mxu0 %v178
    %v199 = vpop.f32.mrf.mxu0
    %v200 = vadd.f32 0.0, %v199
    %201 = vdwg.mxu0
    %v202 = vsel %vm150, %v173, -inf
    %203 = vmax.xlane.f32.xlu0 %v202
    %v204 = vpop.xlane.xlu0 %203
    %v205 = vsel %vm150, %v200, -inf
    %206 = vmax.xlane.f32.xlu0 %v205
    %v207 = vpop.xlane.xlu0 %206
    %v208 = vsub.f32 %v173, %v204
    %v209 = vsub.f32 %v200, %v207
    %v210 = vmul.f32 %v208, 1.442695
    %v211 = vpow.pop %v210
    %v212 = vmul.f32 %v209, 1.442695
    %v213 = vpow.pop %v212
    %v214 = vsel %vm150, %v211, 0.0
    %215 = vadd.xlane.f32.xlu0 %v214
    %v216 = vpop.xlane.xlu0 %215
    %v217 = vsel %vm150, %v213, 0.0
    %218 = vadd.xlane.f32.xlu0 %v217
    %v219 = vpop.xlane.xlu0 %218
    %v220 = vrcp.pop %v216
    %v221 = vmul.f32 %v216, %v220
    %v222 = vsub.f32 1.0, %v221
    %v223 = vmul.f32 %v220, %v222
    %v224 = vadd.f32 %v220, %v223
    %vm225 = vweird.f32 %v216
    %vm226 = vweird.f32 %v220
    %vm227 = vmor %vm225, %vm226
    %v228 = vsel %vm227, %v220, %v224
    %v229 = vand.u32 2147483647, %v216
    %vm230 = vcmp.eq.f32.partialorder %v229, 8.507059e+37
    %v231 = vand.u32 %v216, 2147483648
    %v232 = vor.u32 1.1754944e-38, %v231
    %v233 = vsel %vm230, %v232, %v228
    %v234 = vrcp.pop %v219
    %v235 = vmul.f32 %v219, %v234
    %v236 = vsub.f32 1.0, %v235
    %v237 = vmul.f32 %v234, %v236
    %v238 = vadd.f32 %v234, %v237
    %vm239 = vweird.f32 %v219
    %vm240 = vweird.f32 %v234
    %vm241 = vmor %vm239, %vm240
    %v242 = vsel %vm241, %v234, %v238
    %v243 = vand.u32 2147483647, %v219
    %vm244 = vcmp.eq.f32.partialorder %v243, 8.507059e+37
    %v245 = vand.u32 %v219, 2147483648
    %v246 = vor.u32 1.1754944e-38, %v245
    %v247 = vsel %vm244, %v246, %v242
    %v248 = vmul.f32 %v211, %v233
    %v249 = vmul.f32 %v213, %v247
    %250 = vrot.lane.b32.xlu0 %v142, 64
    %v251 = vpop.permute.xlu0 %250
    %v254 = vsel %vm150, %v248, 0
    %256 = vmatpush.msra.mxu0 0.0
    %257 = vmatpush.msra.mxu0 0.0
    %258 = vmatpush.msra.mxu0 0.0
    %259 = vmatpush.msra.mxu0 0.0
    %260 = vmatpush.msra.mxu0 0.0
    %261 = vmatpush.msra.mxu0 0.0
    %262 = vmatpush.msra.mxu0 0.0
    %263 = vmatpush.msra.mxu0 0.0
    %264 = vmatpush.msra.mxu0 0.0
    %265 = vmatpush.msra.mxu0 0.0
    %266 = vmatpush.msra.mxu0 0.0
    %267 = vmatpush.msra.mxu0 0.0
    %268 = vmatpush.msra.mxu0 0.0
    %269 = vmatpush.msra.mxu0 0.0
    %270 = vmatpush.msra.mxu0 0.0
    %271 = vmatpush.msra.mxu0 %v251
    %272 = vmatmul.f32.gmra.mxu0 %v254
    %v273 = vpop.f32.mrf.mxu0
    %v274 = vadd.f32 0.0, %v273
    %275 = vdwg.mxu0
    %276 = vrot.lane.b32.xlu0 %v145, 64
    %v277 = vpop.permute.xlu0 %276
    %v280 = vsel %vm150, %v249, 0
    %282 = vmatpush.msra.mxu0 0.0
    %283 = vmatpush.msra.mxu0 0.0
    %284 = vmatpush.msra.mxu0 0.0
    %285 = vmatpush.msra.mxu0 0.0
    %286 = vmatpush.msra.mxu0 0.0
    %287 = vmatpush.msra.mxu0 0.0
    %288 = vmatpush.msra.mxu0 0.0
    %289 = vmatpush.msra.mxu0 0.0
    %290 = vmatpush.msra.mxu0 0.0
    %291 = vmatpush.msra.mxu0 0.0
    %292 = vmatpush.msra.mxu0 0.0
    %293 = vmatpush.msra.mxu0 0.0
    %294 = vmatpush.msra.mxu0 0.0
    %295 = vmatpush.msra.mxu0 0.0
    %296 = vmatpush.msra.mxu0 0.0
    %297 = vmatpush.msra.mxu0 %v277
    %298 = vmatmul.f32.gmra.mxu0 %v280
    %v299 = vpop.f32.mrf.mxu0
    %v300 = vadd.f32 0.0, %v299
    %301 = vdwg.mxu0
    %302 = vrot.lane.b32.xlu0 %v142, 120
    %v303 = vpop.permute.xlu0 %302
    %304 = vrot.lane.b32.xlu0 %v142, 88
    %v305 = vpop.permute.xlu0 %304
    %v306 = vsel %vm150, %v303, 0
    %v308 = vsel %vm150, %v305, 0
    %310 = vmatpush.xpose.msra.mxu0 0.0
    %311 = vmatpush.xpose.msra.mxu0 0.0
    %312 = vmatpush.xpose.msra.mxu0 0.0
    %313 = vmatpush.xpose.msra.mxu0 0.0
    %314 = vmatpush.xpose.msra.mxu0 0.0
    %315 = vmatpush.xpose.msra.mxu0 0.0
    %316 = vmatpush.xpose.msra.mxu0 0.0
    %317 = vmatpush.xpose.msra.mxu0 0.0
    %318 = vmatpush.xpose.msra.mxu0 0.0
    %319 = vmatpush.xpose.msra.mxu0 0.0
    %320 = vmatpush.xpose.msra.mxu0 0.0
    %321 = vmatpush.xpose.msra.mxu0 0.0
    %322 = vmatpush.xpose.msra.mxu0 0.0
    %323 = vmatpush.xpose.msra.mxu0 0.0
    %324 = vmatpush.xpose.msra.mxu0 0.0
    %325 = vmatpush.xpose.msra.mxu0 %v308
    %326 = vmatmul.f32.gmra.mxu0 %v306
    %v327 = vpop.f32.mrf.mxu0
    %v328 = vadd.f32 0.0, %v327
    %329 = vdwg.mxu0
    %330 = vrot.lane.b32.xlu0 %v145, 120
    %v331 = vpop.permute.xlu0 %330
    %332 = vrot.lane.b32.xlu0 %v145, 88
    %v333 = vpop.permute.xlu0 %332
    %v334 = vsel %vm150, %v331, 0
    %v336 = vsel %vm150, %v333, 0
    %338 = vmatpush.xpose.msra.mxu0 0.0
    %339 = vmatpush.xpose.msra.mxu0 0.0
    %340 = vmatpush.xpose.msra.mxu0 0.0
    %341 = vmatpush.xpose.msra.mxu0 0.0
    %342 = vmatpush.xpose.msra.mxu0 0.0
    %343 = vmatpush.xpose.msra.mxu0 0.0
    %344 = vmatpush.xpose.msra.mxu0 0.0
    %345 = vmatpush.xpose.msra.mxu0 0.0
    %346 = vmatpush.xpose.msra.mxu0 0.0
    %347 = vmatpush.xpose.msra.mxu0 0.0
    %348 = vmatpush.xpose.msra.mxu0 0.0
    %349 = vmatpush.xpose.msra.mxu0 0.0
    %350 = vmatpush.xpose.msra.mxu0 0.0
    %351 = vmatpush.xpose.msra.mxu0 0.0
    %352 = vmatpush.xpose.msra.mxu0 0.0
    %353 = vmatpush.xpose.msra.mxu0 %v336
    %354 = vmatmul.f32.gmra.mxu0 %v334
    %v355 = vpop.f32.mrf.mxu0
    %v356 = vadd.f32 0.0, %v355
    %357 = vdwg.mxu0
    %v358 = vsel %vm150, %v328, -inf
    %359 = vmax.xlane.f32.xlu0 %v358
    %v360 = vpop.xlane.xlu0 %359
    %v361 = vsel %vm150, %v356, -inf
    %362 = vmax.xlane.f32.xlu0 %v361
    %v363 = vpop.xlane.xlu0 %362
    %v364 = vsub.f32 %v328, %v360
    %v365 = vsub.f32 %v356, %v363
    %v366 = vmul.f32 %v364, 1.442695
    %v367 = vpow.pop %v366
    %v368 = vmul.f32 %v365, 1.442695
    %v369 = vpow.pop %v368
    %v370 = vsel %vm150, %v367, 0.0
    %371 = vadd.xlane.f32.xlu0 %v370
    %v372 = vpop.xlane.xlu0 %371
    %v373 = vsel %vm150, %v369, 0.0
    %374 = vadd.xlane.f32.xlu0 %v373
    %v375 = vpop.xlane.xlu0 %374
    %v376 = vrcp.pop %v372
    %v377 = vmul.f32 %v372, %v376
    %v378 = vsub.f32 1.0, %v377
    %v379 = vmul.f32 %v376, %v378
    %v380 = vadd.f32 %v376, %v379
    %vm381 = vweird.f32 %v372
    %vm382 = vweird.f32 %v376
    %vm383 = vmor %vm381, %vm382
    %v384 = vsel %vm383, %v376, %v380
    %v385 = vand.u32 2147483647, %v372
    %vm386 = vcmp.eq.f32.partialorder %v385, 8.507059e+37
    %v387 = vand.u32 %v372, 2147483648
    %v388 = vor.u32 1.1754944e-38, %v387
    %v389 = vsel %vm386, %v388, %v384
    %v390 = vrcp.pop %v375
    %v391 = vmul.f32 %v375, %v390
    %v392 = vsub.f32 1.0, %v391
    %v393 = vmul.f32 %v390, %v392
    %v394 = vadd.f32 %v390, %v393
    %vm395 = vweird.f32 %v375
    %vm396 = vweird.f32 %v390
    %vm397 = vmor %vm395, %vm396
    %v398 = vsel %vm397, %v390, %v394
    %v399 = vand.u32 2147483647, %v375
    %vm400 = vcmp.eq.f32.partialorder %v399, 8.507059e+37
    %v401 = vand.u32 %v375, 2147483648
    %v402 = vor.u32 1.1754944e-38, %v401
    %v403 = vsel %vm400, %v402, %v398
    %v404 = vmul.f32 %v367, %v389
    %v405 = vmul.f32 %v369, %v403
    %406 = vrot.lane.b32.xlu0 %v142, 56
    %v407 = vpop.permute.xlu0 %406
    %v410 = vsel %vm150, %v404, 0
    %412 = vmatpush.msra.mxu0 0.0
    %413 = vmatpush.msra.mxu0 0.0
    %414 = vmatpush.msra.mxu0 0.0
    %415 = vmatpush.msra.mxu0 0.0
    %416 = vmatpush.msra.mxu0 0.0
    %417 = vmatpush.msra.mxu0 0.0
    %418 = vmatpush.msra.mxu0 0.0
    %419 = vmatpush.msra.mxu0 0.0
    %420 = vmatpush.msra.mxu0 0.0
    %421 = vmatpush.msra.mxu0 0.0
    %422 = vmatpush.msra.mxu0 0.0
    %423 = vmatpush.msra.mxu0 0.0
    %424 = vmatpush.msra.mxu0 0.0
    %425 = vmatpush.msra.mxu0 0.0
    %426 = vmatpush.msra.mxu0 0.0
    %427 = vmatpush.msra.mxu0 %v407
    %428 = vmatmul.f32.gmra.mxu0 %v410
    %v429 = vpop.f32.mrf.mxu0
    %v430 = vadd.f32 0.0, %v429
    %431 = vdwg.mxu0
    %432 = vrot.lane.b32.xlu0 %v145, 56
    %v433 = vpop.permute.xlu0 %432
    %v436 = vsel %vm150, %v405, 0
    %438 = vmatpush.msra.mxu0 0.0
    %439 = vmatpush.msra.mxu0 0.0
    %440 = vmatpush.msra.mxu0 0.0
    %441 = vmatpush.msra.mxu0 0.0
    %442 = vmatpush.msra.mxu0 0.0
    %443 = vmatpush.msra.mxu0 0.0
    %444 = vmatpush.msra.mxu0 0.0
    %445 = vmatpush.msra.mxu0 0.0
    %446 = vmatpush.msra.mxu0 0.0
    %447 = vmatpush.msra.mxu0 0.0
    %448 = vmatpush.msra.mxu0 0.0
    %449 = vmatpush.msra.mxu0 0.0
    %450 = vmatpush.msra.mxu0 0.0
    %451 = vmatpush.msra.mxu0 0.0
    %452 = vmatpush.msra.mxu0 0.0
    %453 = vmatpush.msra.mxu0 %v433
    %454 = vmatmul.f32.gmra.mxu0 %v436
    %v455 = vpop.f32.mrf.mxu0
    %v456 = vadd.f32 0.0, %v455
    %457 = vdwg.mxu0
    %458 = vrot.lane.b32.xlu0 %v142, 112
    %v459 = vpop.permute.xlu0 %458
    %460 = vrot.lane.b32.xlu0 %v142, 80
    %v461 = vpop.permute.xlu0 %460
    %v462 = vsel %vm150, %v459, 0
    %v464 = vsel %vm150, %v461, 0
    %466 = vmatpush.xpose.msra.mxu0 0.0
    %467 = vmatpush.xpose.msra.mxu0 0.0
    %468 = vmatpush.xpose.msra.mxu0 0.0
    %469 = vmatpush.xpose.msra.mxu0 0.0
    %470 = vmatpush.xpose.msra.mxu0 0.0
    %471 = vmatpush.xpose.msra.mxu0 0.0
    %472 = vmatpush.xpose.msra.mxu0 0.0
    %473 = vmatpush.xpose.msra.mxu0 0.0
    %474 = vmatpush.xpose.msra.mxu0 0.0
    %475 = vmatpush.xpose.msra.mxu0 0.0
    %476 = vmatpush.xpose.msra.mxu0 0.0
    %477 = vmatpush.xpose.msra.mxu0 0.0
    %478 = vmatpush.xpose.msra.mxu0 0.0
    %479 = vmatpush.xpose.msra.mxu0 0.0
    %480 = vmatpush.xpose.msra.mxu0 0.0
    %481 = vmatpush.xpose.msra.mxu0 %v464
    %482 = vmatmul.f32.gmra.mxu0 %v462
    %v483 = vpop.f32.mrf.mxu0
    %v484 = vadd.f32 0.0, %v483
    %485 = vdwg.mxu0
    %486 = vrot.lane.b32.xlu0 %v145, 112
    %v487 = vpop.permute.xlu0 %486
    %488 = vrot.lane.b32.xlu0 %v145, 80
    %v489 = vpop.permute.xlu0 %488
    %v490 = vsel %vm150, %v487, 0
    %v492 = vsel %vm150, %v489, 0
    %494 = vmatpush.xpose.msra.mxu0 0.0
    %495 = vmatpush.xpose.msra.mxu0 0.0
    %496 = vmatpush.xpose.msra.mxu0 0.0
    %497 = vmatpush.xpose.msra.mxu0 0.0
    %498 = vmatpush.xpose.msra.mxu0 0.0
    %499 = vmatpush.xpose.msra.mxu0 0.0
    %500 = vmatpush.xpose.msra.mxu0 0.0
    %501 = vmatpush.xpose.msra.mxu0 0.0
    %502 = vmatpush.xpose.msra.mxu0 0.0
    %503 = vmatpush.xpose.msra.mxu0 0.0
    %504 = vmatpush.xpose.msra.mxu0 0.0
    %505 = vmatpush.xpose.msra.mxu0 0.0
    %506 = vmatpush.xpose.msra.mxu0 0.0
    %507 = vmatpush.xpose.msra.mxu0 0.0
    %508 = vmatpush.xpose.msra.mxu0 0.0
    %509 = vmatpush.xpose.msra.mxu0 %v492
    %510 = vmatmul.f32.gmra.mxu0 %v490
    %v511 = vpop.f32.mrf.mxu0
    %v512 = vadd.f32 0.0, %v511
    %513 = vdwg.mxu0
    %v514 = vsel %vm150, %v484, -inf
    %515 = vmax.xlane.f32.xlu0 %v514
    %v516 = vpop.xlane.xlu0 %515
    %v517 = vsel %vm150, %v512, -inf
    %518 = vmax.xlane.f32.xlu0 %v517
    %v519 = vpop.xlane.xlu0 %518
    %v520 = vsub.f32 %v484, %v516
    %v521 = vsub.f32 %v512, %v519
    %v522 = vmul.f32 %v520, 1.442695
    %v523 = vpow.pop %v522
    %v524 = vmul.f32 %v521, 1.442695
    %v525 = vpow.pop %v524
    %v526 = vsel %vm150, %v523, 0.0
    %527 = vadd.xlane.f32.xlu0 %v526
    %v528 = vpop.xlane.xlu0 %527
    %v529 = vsel %vm150, %v525, 0.0
    %530 = vadd.xlane.f32.xlu0 %v529
    %v531 = vpop.xlane.xlu0 %530
    %v532 = vrcp.pop %v528
    %v533 = vmul.f32 %v528, %v532
    %v534 = vsub.f32 1.0, %v533
    %v535 = vmul.f32 %v532, %v534
    %v536 = vadd.f32 %v532, %v535
    %vm537 = vweird.f32 %v528
    %vm538 = vweird.f32 %v532
    %vm539 = vmor %vm537, %vm538
    %v540 = vsel %vm539, %v532, %v536
    %v541 = vand.u32 2147483647, %v528
    %vm542 = vcmp.eq.f32.partialorder %v541, 8.507059e+37
    %v543 = vand.u32 %v528, 2147483648
    %v544 = vor.u32 1.1754944e-38, %v543
    %v545 = vsel %vm542, %v544, %v540
    %v546 = vrcp.pop %v531
    %v547 = vmul.f32 %v531, %v546
    %v548 = vsub.f32 1.0, %v547
    %v549 = vmul.f32 %v546, %v548
    %v550 = vadd.f32 %v546, %v549
    %vm551 = vweird.f32 %v531
    %vm552 = vweird.f32 %v546
    %vm553 = vmor %vm551, %vm552
    %v554 = vsel %vm553, %v546, %v550
    %v555 = vand.u32 2147483647, %v531
    %vm556 = vcmp.eq.f32.partialorder %v555, 8.507059e+37
    %v557 = vand.u32 %v531, 2147483648
    %v558 = vor.u32 1.1754944e-38, %v557
    %v559 = vsel %vm556, %v558, %v554
    %v560 = vmul.f32 %v523, %v545
    %v561 = vmul.f32 %v525, %v559
    %562 = vrot.lane.b32.xlu0 %v142, 48
    %v563 = vpop.permute.xlu0 %562
    %v566 = vsel %vm150, %v560, 0
    %568 = vmatpush.msra.mxu0 0.0
    %569 = vmatpush.msra.mxu0 0.0
    %570 = vmatpush.msra.mxu0 0.0
    %571 = vmatpush.msra.mxu0 0.0
    %572 = vmatpush.msra.mxu0 0.0
    %573 = vmatpush.msra.mxu0 0.0
    %574 = vmatpush.msra.mxu0 0.0
    %575 = vmatpush.msra.mxu0 0.0
    %576 = vmatpush.msra.mxu0 0.0
    %577 = vmatpush.msra.mxu0 0.0
    %578 = vmatpush.msra.mxu0 0.0
    %579 = vmatpush.msra.mxu0 0.0
    %580 = vmatpush.msra.mxu0 0.0
    %581 = vmatpush.msra.mxu0 0.0
    %582 = vmatpush.msra.mxu0 0.0
    %583 = vmatpush.msra.mxu0 %v563
    %584 = vmatmul.f32.gmra.mxu0 %v566
    %v585 = vpop.f32.mrf.mxu0
    %v586 = vadd.f32 0.0, %v585
    %587 = vdwg.mxu0
    %588 = vrot.lane.b32.xlu0 %v145, 48
    %v589 = vpop.permute.xlu0 %588
    %v592 = vsel %vm150, %v561, 0
    %594 = vmatpush.msra.mxu0 0.0
    %595 = vmatpush.msra.mxu0 0.0
    %596 = vmatpush.msra.mxu0 0.0
    %597 = vmatpush.msra.mxu0 0.0
    %598 = vmatpush.msra.mxu0 0.0
    %599 = vmatpush.msra.mxu0 0.0
    %600 = vmatpush.msra.mxu0 0.0
    %601 = vmatpush.msra.mxu0 0.0
    %602 = vmatpush.msra.mxu0 0.0
    %603 = vmatpush.msra.mxu0 0.0
    %604 = vmatpush.msra.mxu0 0.0
    %605 = vmatpush.msra.mxu0 0.0
    %606 = vmatpush.msra.mxu0 0.0
    %607 = vmatpush.msra.mxu0 0.0
    %608 = vmatpush.msra.mxu0 0.0
    %609 = vmatpush.msra.mxu0 %v589
    %610 = vmatmul.f32.gmra.mxu0 %v592
    %v611 = vpop.f32.mrf.mxu0
    %v612 = vadd.f32 0.0, %v611
    %613 = vdwg.mxu0
    %614 = vrot.lane.b32.xlu0 %v142, 104
    %v615 = vpop.permute.xlu0 %614
    %616 = vrot.lane.b32.xlu0 %v142, 72
    %v617 = vpop.permute.xlu0 %616
    %v618 = vsel %vm150, %v615, 0
    %v620 = vsel %vm150, %v617, 0
    %622 = vmatpush.xpose.msra.mxu0 0.0
    %623 = vmatpush.xpose.msra.mxu0 0.0
    %624 = vmatpush.xpose.msra.mxu0 0.0
    %625 = vmatpush.xpose.msra.mxu0 0.0
    %626 = vmatpush.xpose.msra.mxu0 0.0
    %627 = vmatpush.xpose.msra.mxu0 0.0
    %628 = vmatpush.xpose.msra.mxu0 0.0
    %629 = vmatpush.xpose.msra.mxu0 0.0
    %630 = vmatpush.xpose.msra.mxu0 0.0
    %631 = vmatpush.xpose.msra.mxu0 0.0
    %632 = vmatpush.xpose.msra.mxu0 0.0
    %633 = vmatpush.xpose.msra.mxu0 0.0
    %634 = vmatpush.xpose.msra.mxu0 0.0
    %635 = vmatpush.xpose.msra.mxu0 0.0
    %636 = vmatpush.xpose.msra.mxu0 0.0
    %637 = vmatpush.xpose.msra.mxu0 %v620
    %638 = vmatmul.f32.gmra.mxu0 %v618
    %v639 = vpop.f32.mrf.mxu0
    %v640 = vadd.f32 0.0, %v639
    %641 = vdwg.mxu0
    %642 = vrot.lane.b32.xlu0 %v145, 104
    %v643 = vpop.permute.xlu0 %642
    %644 = vrot.lane.b32.xlu0 %v145, 72
    %v645 = vpop.permute.xlu0 %644
    %v646 = vsel %vm150, %v643, 0
    %v648 = vsel %vm150, %v645, 0
    %650 = vmatpush.xpose.msra.mxu0 0.0
    %651 = vmatpush.xpose.msra.mxu0 0.0
    %652 = vmatpush.xpose.msra.mxu0 0.0
    %653 = vmatpush.xpose.msra.mxu0 0.0
    %654 = vmatpush.xpose.msra.mxu0 0.0
    %655 = vmatpush.xpose.msra.mxu0 0.0
    %656 = vmatpush.xpose.msra.mxu0 0.0
    %657 = vmatpush.xpose.msra.mxu0 0.0
    %658 = vmatpush.xpose.msra.mxu0 0.0
    %659 = vmatpush.xpose.msra.mxu0 0.0
    %660 = vmatpush.xpose.msra.mxu0 0.0
    %661 = vmatpush.xpose.msra.mxu0 0.0
    %662 = vmatpush.xpose.msra.mxu0 0.0
    %663 = vmatpush.xpose.msra.mxu0 0.0
    %664 = vmatpush.xpose.msra.mxu0 0.0
    %665 = vmatpush.xpose.msra.mxu0 %v648
    %666 = vmatmul.f32.gmra.mxu0 %v646
    %v667 = vpop.f32.mrf.mxu0
    %v668 = vadd.f32 0.0, %v667
    %669 = vdwg.mxu0
    %v670 = vsel %vm150, %v640, -inf
    %671 = vmax.xlane.f32.xlu0 %v670
    %v672 = vpop.xlane.xlu0 %671
    %v673 = vsel %vm150, %v668, -inf
    %674 = vmax.xlane.f32.xlu0 %v673
    %v675 = vpop.xlane.xlu0 %674
    %v676 = vsub.f32 %v640, %v672
    %v677 = vsub.f32 %v668, %v675
    %v678 = vmul.f32 %v676, 1.442695
    %v679 = vpow.pop %v678
    %v680 = vmul.f32 %v677, 1.442695
    %v681 = vpow.pop %v680
    %v682 = vsel %vm150, %v679, 0.0
    %683 = vadd.xlane.f32.xlu0 %v682
    %v684 = vpop.xlane.xlu0 %683
    %v685 = vsel %vm150, %v681, 0.0
    %686 = vadd.xlane.f32.xlu0 %v685
    %v687 = vpop.xlane.xlu0 %686
    %v688 = vrcp.pop %v684
    %v689 = vmul.f32 %v684, %v688
    %v690 = vsub.f32 1.0, %v689
    %v691 = vmul.f32 %v688, %v690
    %v692 = vadd.f32 %v688, %v691
    %vm693 = vweird.f32 %v684
    %vm694 = vweird.f32 %v688
    %vm695 = vmor %vm693, %vm694
    %v696 = vsel %vm695, %v688, %v692
    %v697 = vand.u32 2147483647, %v684
    %vm698 = vcmp.eq.f32.partialorder %v697, 8.507059e+37
    %v699 = vand.u32 %v684, 2147483648
    %v700 = vor.u32 1.1754944e-38, %v699
    %v701 = vsel %vm698, %v700, %v696
    %v702 = vrcp.pop %v687
    %v703 = vmul.f32 %v687, %v702
    %v704 = vsub.f32 1.0, %v703
    %v705 = vmul.f32 %v702, %v704
    %v706 = vadd.f32 %v702, %v705
    %vm707 = vweird.f32 %v687
    %vm708 = vweird.f32 %v702
    %vm709 = vmor %vm707, %vm708
    %v710 = vsel %vm709, %v702, %v706
    %v711 = vand.u32 2147483647, %v687
    %vm712 = vcmp.eq.f32.partialorder %v711, 8.507059e+37
    %v713 = vand.u32 %v687, 2147483648
    %v714 = vor.u32 1.1754944e-38, %v713
    %v715 = vsel %vm712, %v714, %v710
    %v716 = vmul.f32 %v679, %v701
    %v717 = vmul.f32 %v681, %v715
    %718 = vrot.lane.b32.xlu0 %v142, 40
    %v719 = vpop.permute.xlu0 %718
    %v722 = vsel %vm150, %v716, 0
    %724 = vmatpush.msra.mxu0 0.0
    %725 = vmatpush.msra.mxu0 0.0
    %726 = vmatpush.msra.mxu0 0.0
    %727 = vmatpush.msra.mxu0 0.0
    %728 = vmatpush.msra.mxu0 0.0
    %729 = vmatpush.msra.mxu0 0.0
    %730 = vmatpush.msra.mxu0 0.0
    %731 = vmatpush.msra.mxu0 0.0
    %732 = vmatpush.msra.mxu0 0.0
    %733 = vmatpush.msra.mxu0 0.0
    %734 = vmatpush.msra.mxu0 0.0
    %735 = vmatpush.msra.mxu0 0.0
    %736 = vmatpush.msra.mxu0 0.0
    %737 = vmatpush.msra.mxu0 0.0
    %738 = vmatpush.msra.mxu0 0.0
    %739 = vmatpush.msra.mxu0 %v719
    %740 = vmatmul.f32.gmra.mxu0 %v722
    %v741 = vpop.f32.mrf.mxu0
    %v742 = vadd.f32 0.0, %v741
    %743 = vdwg.mxu0
    %744 = vrot.lane.b32.xlu0 %v145, 40
    %v745 = vpop.permute.xlu0 %744
    %v748 = vsel %vm150, %v717, 0
    %750 = vmatpush.msra.mxu0 0.0
    %751 = vmatpush.msra.mxu0 0.0
    %752 = vmatpush.msra.mxu0 0.0
    %753 = vmatpush.msra.mxu0 0.0
    %754 = vmatpush.msra.mxu0 0.0
    %755 = vmatpush.msra.mxu0 0.0
    %756 = vmatpush.msra.mxu0 0.0
    %757 = vmatpush.msra.mxu0 0.0
    %758 = vmatpush.msra.mxu0 0.0
    %759 = vmatpush.msra.mxu0 0.0
    %760 = vmatpush.msra.mxu0 0.0
    %761 = vmatpush.msra.mxu0 0.0
    %762 = vmatpush.msra.mxu0 0.0
    %763 = vmatpush.msra.mxu0 0.0
    %764 = vmatpush.msra.mxu0 0.0
    %765 = vmatpush.msra.mxu0 %v745
    %766 = vmatmul.f32.gmra.mxu0 %v748
    %v767 = vpop.f32.mrf.mxu0
    %v768 = vadd.f32 0.0, %v767
    %769 = vdwg.mxu0
    %772 = vrot.lane.b32.xlu0 %v430, 8
    %v773 = vpop.permute.xlu0 %772
    %774 = vrot.lane.b32.xlu0 %v456, 8
    %v775 = vpop.permute.xlu0 %774
    %780 = vrot.lane.b32.xlu0 %v586, 16
    %v781 = vpop.permute.xlu0 %780
    %782 = vrot.lane.b32.xlu0 %v612, 16
    %v783 = vpop.permute.xlu0 %782
    %788 = vrot.lane.b32.xlu0 %v742, 24
    %v789 = vpop.permute.xlu0 %788
    %790 = vrot.lane.b32.xlu0 %v768, 24
    %v791 = vpop.permute.xlu0 %790
    %v794 = vsel %vm150, %v274, %v773
    %v795 = vsel %vm150, %v300, %v775
    %vm796 = vcmask 130048
    %v797 = vsel %vm796, %v794, %v781
    %v798 = vsel %vm796, %v795, %v783
    %vm799 = vcmask 195584
    %v800 = vsel %vm799, %v797, %v789
    %v801 = vsel %vm799, %v798, %v791
    %v802 = vld [vmem:[%s2] sm:$0xff]
    %v803 = vld [vmem:[%s2 + $0x8] sm:$0xff]
    %v804 = vld [vmem:[%s2 + $0x10] sm:$0xff]
    %v805 = vld [vmem:[%s2 + $0x18] sm:$0xff]
    %v806 = vld [vmem:[%s3] sm:$0x1]
    %v808 = vperm.slane %v806, 0
    %v811 = vsel %vm117, %v800, 0
    %v814 = vsel %vm117, %v801, 0
    %816 = vmatpush.msra.mxu0 0.0
    %817 = vmatpush.msra.mxu0 0.0
    %818 = vmatpush.msra.mxu0 0.0
    %819 = vmatpush.msra.mxu0 0.0
    %820 = vmatpush.msra.mxu0 0.0
    %821 = vmatpush.msra.mxu0 0.0
    %822 = vmatpush.msra.mxu0 0.0
    %823 = vmatpush.msra.mxu0 0.0
    %824 = vmatpush.msra.mxu0 0.0
    %825 = vmatpush.msra.mxu0 0.0
    %826 = vmatpush.msra.mxu0 0.0
    %827 = vmatpush.msra.mxu0 0.0
    %828 = vmatpush.msra.mxu0 %v805
    %829 = vmatpush.msra.mxu0 %v804
    %830 = vmatpush.msra.mxu0 %v803
    %831 = vmatpush.msra.mxu0 %v802
    %832 = vmatmul.f32.gmra.mxu0 %v811
    %v833 = vpop.f32.mrf.mxu0
    %v834 = vadd.f32 %v808, %v833
    %835 = vmatmul.f32.gmra.mxu0 %v814
    %v836 = vpop.f32.mrf.mxu0
    %v837 = vadd.f32 %v808, %v836
    %838 = vdwg.mxu0
    %v839 = vadd.f32 %v111, %v834
    %v840 = vadd.f32 %v112, %v837
    %v841 = vld [vmem:[#allocation5] sm:$0x1]
    %v842 = vld [vmem:[#allocation7] sm:$0x1]
    %v843 = vsel %vm117, %v839, 0.0
    %844 = vadd.xlane.f32.xlu0 %v843
    %v845 = vpop.xlane.xlu0 %844
    %v846 = vsel %vm117, %v840, 0.0
    %847 = vadd.xlane.f32.xlu0 %v846
    %v848 = vpop.xlane.xlu0 %847
    %v849 = vrcp.pop 32.0
    %v850 = vmul.f32 32.0, %v849
    %v851 = vsub.f32 1.0, %v850
    %v852 = vmul.f32 %v849, %v851
    %v853 = vadd.f32 %v849, %v852
    %vm854 = vweird.f32 %v849
    %v855 = vsel %vm854, %v849, %v853
    %v856 = vmul.f32 %v845, %v855
    %v857 = vmul.f32 %v848, %v855
    %v858 = vsub.f32 %v839, %v856
    %v859 = vsub.f32 %v840, %v857
    %v860 = vmul.f32 %v858, %v858
    %v861 = vmul.f32 %v859, %v859
    %v862 = vsel %vm117, %v860, 0.0
    %863 = vadd.xlane.f32.xlu0 %v862
    %v864 = vpop.xlane.xlu0 %863
    %v865 = vsel %vm117, %v861, 0.0
    %866 = vadd.xlane.f32.xlu0 %v865
    %v867 = vpop.xlane.xlu0 %866
    %v868 = vrcp.pop 31.0
    %v869 = vmul.f32 31.0, %v868
    %v870 = vsub.f32 1.0, %v869
    %v871 = vmul.f32 %v868, %v870
    %v872 = vadd.f32 %v868, %v871
    %vm873 = vweird.f32 %v868
    %v874 = vsel %vm873, %v868, %v872
    %v875 = vmul.f32 %v864, %v874
    %v876 = vmul.f32 %v867, %v874
    %v877 = vrsqrt.pop %v875
    %v878 = vmul.f32 %v877, %v875
    %v879 = vmul.f32 %v878, %v877
    %v880 = vmul.f32 0.5, %v879
    %v881 = vsub.f32 1.5, %v880
    %v882 = vmul.f32 %v877, %v881
    %v883 = vmul.f32 %v875, %v882
    %vm884 = vcmp.eq.f32.partialorder %v875, inf
    %v885 = vsel %vm884, %v875, %v883
    %vm886 = vcmp.eq.f32.partialorder %v875, 0.0
    %v887 = vand.u32 %v875, 2147483648
    %v888 = vsel %vm886, %v887, %v885
    %v889 = vrsqrt.pop %v876
    %v890 = vmul.f32 %v889, %v876
    %v891 = vmul.f32 %v890, %v889
    %v892 = vmul.f32 0.5, %v891
    %v893 = vsub.f32 1.5, %v892
    %v894 = vmul.f32 %v889, %v893
    %v895 = vmul.f32 %v876, %v894
    %vm896 = vcmp.eq.f32.partialorder %v876, inf
    %v897 = vsel %vm896, %v876, %v895
    %vm898 = vcmp.eq.f32.partialorder %v876, 0.0
    %v899 = vand.u32 %v876, 2147483648
    %v900 = vsel %vm898, %v899, %v897
    %v901 = vadd.f32 %v888, 1e-06
    %v902 = vadd.f32 %v900, 1e-06
    %v903 = vrcp.pop %v901
    %v904 = vmul.f32 %v901, %v903
    %v905 = vsub.f32 1.0, %v904
    %v906 = vmul.f32 %v903, %v905
    %v907 = vadd.f32 %v903, %v906
    %vm908 = vweird.f32 %v901
    %vm909 = vweird.f32 %v903
    %vm910 = vmor %vm908, %vm909
    %v911 = vsel %vm910, %v903, %v907
    %v912 = vand.u32 2147483647, %v901
    %vm913 = vcmp.eq.f32.partialorder %v912, 8.507059e+37
    %v914 = vand.u32 %v901, 2147483648
    %v915 = vor.u32 1.1754944e-38, %v914
    %v916 = vsel %vm913, %v915, %v911
    %v917 = vrcp.pop %v902
    %v918 = vmul.f32 %v902, %v917
    %v919 = vsub.f32 1.0, %v918
    %v920 = vmul.f32 %v917, %v919
    %v921 = vadd.f32 %v917, %v920
    %vm922 = vweird.f32 %v902
    %vm923 = vweird.f32 %v917
    %vm924 = vmor %vm922, %vm923
    %v925 = vsel %vm924, %v917, %v921
    %v926 = vand.u32 2147483647, %v902
    %vm927 = vcmp.eq.f32.partialorder %v926, 8.507059e+37
    %v928 = vand.u32 %v902, 2147483648
    %v929 = vor.u32 1.1754944e-38, %v928
    %v930 = vsel %vm927, %v929, %v925
    %v932 = vperm.slane %v841, 0
    %v934 = vmul.f32 %v932, %v858
    %v935 = vmul.f32 %v932, %v859
    %v936 = vmul.f32 %v934, %v916
    %v937 = vmul.f32 %v935, %v930
    %v939 = vperm.slane %v842, 0
    %v941 = vadd.f32 %v936, %v939
    %v942 = vadd.f32 %v937, %v939
    %v943 = vld [vmem:[%s6] sm:$0xff]
    %v944 = vld [vmem:[%s6 + $0x8] sm:$0xff]
    %v945 = vld [vmem:[%s6 + $0x10] sm:$0xff]
    %v946 = vld [vmem:[%s6 + $0x18] sm:$0xff]
    %v947 = vld [vmem:[%s7] sm:$0x1]
    %v949 = vperm.slane %v947, 0
    %v952 = vsel %vm117, %v941, 0
    %v955 = vsel %vm117, %v942, 0
    %957 = vmatpush.msra.mxu0 0.0
    %958 = vmatpush.msra.mxu0 0.0
    %959 = vmatpush.msra.mxu0 0.0
    %960 = vmatpush.msra.mxu0 0.0
    %961 = vmatpush.msra.mxu0 0.0
    %962 = vmatpush.msra.mxu0 0.0
    %963 = vmatpush.msra.mxu0 0.0
    %964 = vmatpush.msra.mxu0 0.0
    %965 = vmatpush.msra.mxu0 0.0
    %966 = vmatpush.msra.mxu0 0.0
    %967 = vmatpush.msra.mxu0 0.0
    %968 = vmatpush.msra.mxu0 0.0
    %969 = vmatpush.msra.mxu0 %v946
    %970 = vmatpush.msra.mxu0 %v945
    %971 = vmatpush.msra.mxu0 %v944
    %972 = vmatpush.msra.mxu0 %v943
    %973 = vmatmul.f32.gmra.mxu0 %v952
    %v974 = vpop.f32.mrf.mxu0
    %v975 = vadd.f32 %v949, %v974
    %976 = vmatmul.f32.gmra.mxu0 %v955
    %v977 = vpop.f32.mrf.mxu0
    %v978 = vadd.f32 %v949, %v977
    %979 = vdwg.mxu0
    %v980 = vmax.f32 %v975, 0.0
    %v981 = vmax.f32 %v978, 0.0
    %v982 = vld [vmem:[%s8] sm:$0xff]
    %v983 = vld [vmem:[%s8 + $0x8] sm:$0xff]
    %v984 = vld [vmem:[%s8 + $0x10] sm:$0xff]
    %v985 = vld [vmem:[%s8 + $0x18] sm:$0xff]
    %v986 = vld [vmem:[%s8 + $0x20] sm:$0xff]
    %v987 = vld [vmem:[%s8 + $0x28] sm:$0xff]
    %v988 = vld [vmem:[%s8 + $0x30] sm:$0xff]
    %v989 = vld [vmem:[%s8 + $0x38] sm:$0xff]
    %v990 = vld [vmem:[%s9] sm:$0x1]
    %v992 = vperm.slane %v990, 0
    %vm994 = vcmask 523264
    %v996 = vsel %vm994, %v980, 0
    %v999 = vsel %vm994, %v981, 0
    %1001 = vmatpush.msra.mxu0 0.0
    %1002 = vmatpush.msra.mxu0 0.0
    %1003 = vmatpush.msra.mxu0 0.0
    %1004 = vmatpush.msra.mxu0 0.0
    %1005 = vmatpush.msra.mxu0 0.0
    %1006 = vmatpush.msra.mxu0 0.0
    %1007 = vmatpush.msra.mxu0 0.0
    %1008 = vmatpush.msra.mxu0 0.0
    %1009 = vmatpush.msra.mxu0 %v989
    %1010 = vmatpush.msra.mxu0 %v988
    %1011 = vmatpush.msra.mxu0 %v987
    %1012 = vmatpush.msra.mxu0 %v986
    %1013 = vmatpush.msra.mxu0 %v985
    %1014 = vmatpush.msra.mxu0 %v984
    %1015 = vmatpush.msra.mxu0 %v983
    %1016 = vmatpush.msra.mxu0 %v982
    %1017 = vmatmul.f32.gmra.mxu0 %v996
    %v1018 = vpop.f32.mrf.mxu0
    %v1019 = vadd.f32 %v992, %v1018
    %1020 = vmatmul.f32.gmra.mxu0 %v999
    %v1021 = vpop.f32.mrf.mxu0
    %v1022 = vadd.f32 %v992, %v1021
    %1023 = vdwg.mxu0
    %v1024 = vadd.f32 %v941, %v1019
    %v1025 = vadd.f32 %v942, %v1022
    %v1026 = vld [vmem:[%s10] sm:$0x1]
    %v1027 = vld [vmem:[#allocation8] sm:$0x1]
    %v1028 = vsel %vm117, %v1024, 0.0
    %1029 = vadd.xlane.f32.xlu0 %v1028
    %v1030 = vpop.xlane.xlu0 %1029
    %v1031 = vsel %vm117, %v1025, 0.0
    %1032 = vadd.xlane.f32.xlu0 %v1031
    %v1033 = vpop.xlane.xlu0 %1032
    %v1034 = vmul.f32 %v1030, %v855
    %v1035 = vmul.f32 %v1033, %v855
    %v1036 = vsub.f32 %v1024, %v1034
    %v1037 = vsub.f32 %v1025, %v1035
    %v1038 = vmul.f32 %v1036, %v1036
    %v1039 = vmul.f32 %v1037, %v1037
    %v1040 = vsel %vm117, %v1038, 0.0
    %1041 = vadd.xlane.f32.xlu0 %v1040
    %v1042 = vpop.xlane.xlu0 %1041
    %v1043 = vsel %vm117, %v1039, 0.0
    %1044 = vadd.xlane.f32.xlu0 %v1043
    %v1045 = vpop.xlane.xlu0 %1044
    %v1046 = vmul.f32 %v1042, %v874
    %v1047 = vmul.f32 %v1045, %v874
    %v1048 = vrsqrt.pop %v1046
    %v1049 = vmul.f32 %v1048, %v1046
    %v1050 = vmul.f32 %v1049, %v1048
    %v1051 = vmul.f32 0.5, %v1050
    %v1052 = vsub.f32 1.5, %v1051
    %v1053 = vmul.f32 %v1048, %v1052
    %v1054 = vmul.f32 %v1046, %v1053
    %vm1055 = vcmp.eq.f32.partialorder %v1046, inf
    %v1056 = vsel %vm1055, %v1046, %v1054
    %vm1057 = vcmp.eq.f32.partialorder %v1046, 0.0
    %v1058 = vand.u32 %v1046, 2147483648
    %v1059 = vsel %vm1057, %v1058, %v1056
    %v1060 = vrsqrt.pop %v1047
    %v1061 = vmul.f32 %v1060, %v1047
    %v1062 = vmul.f32 %v1061, %v1060
    %v1063 = vmul.f32 0.5, %v1062
    %v1064 = vsub.f32 1.5, %v1063
    %v1065 = vmul.f32 %v1060, %v1064
    %v1066 = vmul.f32 %v1047, %v1065
    %vm1067 = vcmp.eq.f32.partialorder %v1047, inf
    %v1068 = vsel %vm1067, %v1047, %v1066
    %vm1069 = vcmp.eq.f32.partialorder %v1047, 0.0
    %v1070 = vand.u32 %v1047, 2147483648
    %v1071 = vsel %vm1069, %v1070, %v1068
    %v1072 = vadd.f32 %v1059, 1e-06
    %v1073 = vadd.f32 %v1071, 1e-06
    %v1074 = vrcp.pop %v1072
    %v1075 = vmul.f32 %v1072, %v1074
    %v1076 = vsub.f32 1.0, %v1075
    %v1077 = vmul.f32 %v1074, %v1076
    %v1078 = vadd.f32 %v1074, %v1077
    %vm1079 = vweird.f32 %v1072
    %vm1080 = vweird.f32 %v1074
    %vm1081 = vmor %vm1079, %vm1080
    %v1082 = vsel %vm1081, %v1074, %v1078
    %v1083 = vand.u32 2147483647, %v1072
    %vm1084 = vcmp.eq.f32.partialorder %v1083, 8.507059e+37
    %v1085 = vand.u32 %v1072, 2147483648
    %v1086 = vor.u32 1.1754944e-38, %v1085
    %v1087 = vsel %vm1084, %v1086, %v1082
    %v1088 = vrcp.pop %v1073
    %v1089 = vmul.f32 %v1073, %v1088
    %v1090 = vsub.f32 1.0, %v1089
    %v1091 = vmul.f32 %v1088, %v1090
    %v1092 = vadd.f32 %v1088, %v1091
    %vm1093 = vweird.f32 %v1073
    %vm1094 = vweird.f32 %v1088
    %vm1095 = vmor %vm1093, %vm1094
    %v1096 = vsel %vm1095, %v1088, %v1092
    %v1097 = vand.u32 2147483647, %v1073
    %vm1098 = vcmp.eq.f32.partialorder %v1097, 8.507059e+37
    %v1099 = vand.u32 %v1073, 2147483648
    %v1100 = vor.u32 1.1754944e-38, %v1099
    %v1101 = vsel %vm1098, %v1100, %v1096
    %v1103 = vperm.slane %v1026, 0
    %v1105 = vmul.f32 %v1103, %v1036
    %v1106 = vmul.f32 %v1103, %v1037
    %v1107 = vmul.f32 %v1105, %v1087
    %v1108 = vmul.f32 %v1106, %v1101
    %v1110 = vperm.slane %v1027, 0
    %v1112 = vadd.f32 %v1107, %v1110
    %v1113 = vadd.f32 %v1108, %v1110
    %s1114 = scalar_lea.vmem %s1, 32
    %v1115 = vld [vmem:[%s1114] sm:$0xff]
    %v1116 = vld [vmem:[%s1114 + $0x8] sm:$0xff]
    %v1117 = vld [vmem:[%s1114 + $0x10] sm:$0xff]
    %v1118 = vld [vmem:[%s1114 + $0x18] sm:$0xff]
    %v1120 = vsel %vm117, %v1112, 0
    %v1123 = vsel %vm117, %v1113, 0
    %1125 = vmatpush.msra.mxu0 0.0
    %1126 = vmatpush.msra.mxu0 0.0
    %1127 = vmatpush.msra.mxu0 0.0
    %1128 = vmatpush.msra.mxu0 0.0
    %1129 = vmatpush.msra.mxu0 0.0
    %1130 = vmatpush.msra.mxu0 0.0
    %1131 = vmatpush.msra.mxu0 0.0
    %1132 = vmatpush.msra.mxu0 0.0
    %1133 = vmatpush.msra.mxu0 0.0
    %1134 = vmatpush.msra.mxu0 0.0
    %1135 = vmatpush.msra.mxu0 0.0
    %1136 = vmatpush.msra.mxu0 0.0
    %1137 = vmatpush.msra.mxu0 %v1118
    %1138 = vmatpush.msra.mxu0 %v1117
    %1139 = vmatpush.msra.mxu0 %v1116
    %1140 = vmatpush.msra.mxu0 %v1115
    %1141 = vmatmul.f32.gmra.mxu0 %v1120
    %v1142 = vpop.f32.mrf.mxu0
    %v1143 = vadd.f32 0.0, %v1142
    %1144 = vmatmul.f32.gmra.mxu0 %v1123
    %v1145 = vpop.f32.mrf.mxu0
    %v1146 = vadd.f32 0.0, %v1145
    %1147 = vdwg.mxu0
    %1149 = vrot.lane.b32.xlu0 %v1143, 96
    %v1150 = vpop.permute.xlu0 %1149
    %v1151 = vsel %vm150, %v1143, 0
    %v1153 = vsel %vm150, %v1150, 0
    %1155 = vmatpush.xpose.msra.mxu0 0.0
    %1156 = vmatpush.xpose.msra.mxu0 0.0
    %1157 = vmatpush.xpose.msra.mxu0 0.0
    %1158 = vmatpush.xpose.msra.mxu0 0.0
    %1159 = vmatpush.xpose.msra.mxu0 0.0
    %1160 = vmatpush.xpose.msra.mxu0 0.0
    %1161 = vmatpush.xpose.msra.mxu0 0.0
    %1162 = vmatpush.xpose.msra.mxu0 0.0
    %1163 = vmatpush.xpose.msra.mxu0 0.0
    %1164 = vmatpush.xpose.msra.mxu0 0.0
    %1165 = vmatpush.xpose.msra.mxu0 0.0
    %1166 = vmatpush.xpose.msra.mxu0 0.0
    %1167 = vmatpush.xpose.msra.mxu0 0.0
    %1168 = vmatpush.xpose.msra.mxu0 0.0
    %1169 = vmatpush.xpose.msra.mxu0 0.0
    %1170 = vmatpush.xpose.msra.mxu0 %v1153
    %1171 = vmatmul.f32.gmra.mxu0 %v1151
    %v1172 = vpop.f32.mrf.mxu0
    %v1173 = vadd.f32 0.0, %v1172
    %1174 = vdwg.mxu0
    %1176 = vrot.lane.b32.xlu0 %v1146, 96
    %v1177 = vpop.permute.xlu0 %1176
    %v1178 = vsel %vm150, %v1146, 0
    %v1180 = vsel %vm150, %v1177, 0
    %1182 = vmatpush.xpose.msra.mxu0 0.0
    %1183 = vmatpush.xpose.msra.mxu0 0.0
    %1184 = vmatpush.xpose.msra.mxu0 0.0
    %1185 = vmatpush.xpose.msra.mxu0 0.0
    %1186 = vmatpush.xpose.msra.mxu0 0.0
    %1187 = vmatpush.xpose.msra.mxu0 0.0
    %1188 = vmatpush.xpose.msra.mxu0 0.0
    %1189 = vmatpush.xpose.msra.mxu0 0.0
    %1190 = vmatpush.xpose.msra.mxu0 0.0
    %1191 = vmatpush.xpose.msra.mxu0 0.0
    %1192 = vmatpush.xpose.msra.mxu0 0.0
    %1193 = vmatpush.xpose.msra.mxu0 0.0
    %1194 = vmatpush.xpose.msra.mxu0 0.0
    %1195 = vmatpush.xpose.msra.mxu0 0.0
    %1196 = vmatpush.xpose.msra.mxu0 0.0
    %1197 = vmatpush.xpose.msra.mxu0 %v1180
    %1198 = vmatmul.f32.gmra.mxu0 %v1178
    %v1199 = vpop.f32.mrf.mxu0
    %v1200 = vadd.f32 0.0, %v1199
    %1201 = vdwg.mxu0
    %v1202 = vsel %vm150, %v1173, -inf
    %1203 = vmax.xlane.f32.xlu0 %v1202
    %v1204 = vpop.xlane.xlu0 %1203
    %v1205 = vsel %vm150, %v1200, -inf
    %1206 = vmax.xlane.f32.xlu0 %v1205
    %v1207 = vpop.xlane.xlu0 %1206
    %v1208 = vsub.f32 %v1173, %v1204
    %v1209 = vsub.f32 %v1200, %v1207
    %v1210 = vmul.f32 %v1208, 1.442695
    %v1211 = vpow.pop %v1210
    %v1212 = vmul.f32 %v1209, 1.442695
    %v1213 = vpow.pop %v1212
    %v1214 = vsel %vm150, %v1211, 0.0
    %1215 = vadd.xlane.f32.xlu0 %v1214
    %v1216 = vpop.xlane.xlu0 %1215
    %v1217 = vsel %vm150, %v1213, 0.0
    %1218 = vadd.xlane.f32.xlu0 %v1217
    %v1219 = vpop.xlane.xlu0 %1218
    %v1220 = vrcp.pop %v1216
    %v1221 = vmul.f32 %v1216, %v1220
    %v1222 = vsub.f32 1.0, %v1221
    %v1223 = vmul.f32 %v1220, %v1222
    %v1224 = vadd.f32 %v1220, %v1223
    %vm1225 = vweird.f32 %v1216
    %vm1226 = vweird.f32 %v1220
    %vm1227 = vmor %vm1225, %vm1226
    %v1228 = vsel %vm1227, %v1220, %v1224
    %v1229 = vand.u32 2147483647, %v1216
    %vm1230 = vcmp.eq.f32.partialorder %v1229, 8.507059e+37
    %v1231 = vand.u32 %v1216, 2147483648
    %v1232 = vor.u32 1.1754944e-38, %v1231
    %v1233 = vsel %vm1230, %v1232, %v1228
    %v1234 = vrcp.pop %v1219
    %v1235 = vmul.f32 %v1219, %v1234
    %v1236 = vsub.f32 1.0, %v1235
    %v1237 = vmul.f32 %v1234, %v1236
    %v1238 = vadd.f32 %v1234, %v1237
    %vm1239 = vweird.f32 %v1219
    %vm1240 = vweird.f32 %v1234
    %vm1241 = vmor %vm1239, %vm1240
    %v1242 = vsel %vm1241, %v1234, %v1238
    %v1243 = vand.u32 2147483647, %v1219
    %vm1244 = vcmp.eq.f32.partialorder %v1243, 8.507059e+37
    %v1245 = vand.u32 %v1219, 2147483648
    %v1246 = vor.u32 1.1754944e-38, %v1245
    %v1247 = vsel %vm1244, %v1246, %v1242
    %v1248 = vmul.f32 %v1211, %v1233
    %v1249 = vmul.f32 %v1213, %v1247
    %1250 = vrot.lane.b32.xlu0 %v1143, 64
    %v1251 = vpop.permute.xlu0 %1250
    %v1254 = vsel %vm150, %v1248, 0
    %1256 = vmatpush.msra.mxu0 0.0
    %1257 = vmatpush.msra.mxu0 0.0
    %1258 = vmatpush.msra.mxu0 0.0
    %1259 = vmatpush.msra.mxu0 0.0
    %1260 = vmatpush.msra.mxu0 0.0
    %1261 = vmatpush.msra.mxu0 0.0
    %1262 = vmatpush.msra.mxu0 0.0
    %1263 = vmatpush.msra.mxu0 0.0
    %1264 = vmatpush.msra.mxu0 0.0
    %1265 = vmatpush.msra.mxu0 0.0
    %1266 = vmatpush.msra.mxu0 0.0
    %1267 = vmatpush.msra.mxu0 0.0
    %1268 = vmatpush.msra.mxu0 0.0
    %1269 = vmatpush.msra.mxu0 0.0
    %1270 = vmatpush.msra.mxu0 0.0
    %1271 = vmatpush.msra.mxu0 %v1251
    %1272 = vmatmul.f32.gmra.mxu0 %v1254
    %v1273 = vpop.f32.mrf.mxu0
    %v1274 = vadd.f32 0.0, %v1273
    %1275 = vdwg.mxu0
    %1276 = vrot.lane.b32.xlu0 %v1146, 64
    %v1277 = vpop.permute.xlu0 %1276
    %v1280 = vsel %vm150, %v1249, 0
    %1282 = vmatpush.msra.mxu0 0.0
    %1283 = vmatpush.msra.mxu0 0.0
    %1284 = vmatpush.msra.mxu0 0.0
    %1285 = vmatpush.msra.mxu0 0.0
    %1286 = vmatpush.msra.mxu0 0.0
    %1287 = vmatpush.msra.mxu0 0.0
    %1288 = vmatpush.msra.mxu0 0.0
    %1289 = vmatpush.msra.mxu0 0.0
    %1290 = vmatpush.msra.mxu0 0.0
    %1291 = vmatpush.msra.mxu0 0.0
    %1292 = vmatpush.msra.mxu0 0.0
    %1293 = vmatpush.msra.mxu0 0.0
    %1294 = vmatpush.msra.mxu0 0.0
    %1295 = vmatpush.msra.mxu0 0.0
    %1296 = vmatpush.msra.mxu0 0.0
    %1297 = vmatpush.msra.mxu0 %v1277
    %1298 = vmatmul.f32.gmra.mxu0 %v1280
    %v1299 = vpop.f32.mrf.mxu0
    %v1300 = vadd.f32 0.0, %v1299
    %1301 = vdwg.mxu0
    %1302 = vrot.lane.b32.xlu0 %v1143, 120
    %v1303 = vpop.permute.xlu0 %1302
    %1304 = vrot.lane.b32.xlu0 %v1143, 88
    %v1305 = vpop.permute.xlu0 %1304
    %v1306 = vsel %vm150, %v1303, 0
    %v1308 = vsel %vm150, %v1305, 0
    %1310 = vmatpush.xpose.msra.mxu0 0.0
    %1311 = vmatpush.xpose.msra.mxu0 0.0
    %1312 = vmatpush.xpose.msra.mxu0 0.0
    %1313 = vmatpush.xpose.msra.mxu0 0.0
    %1314 = vmatpush.xpose.msra.mxu0 0.0
    %1315 = vmatpush.xpose.msra.mxu0 0.0
    %1316 = vmatpush.xpose.msra.mxu0 0.0
    %1317 = vmatpush.xpose.msra.mxu0 0.0
    %1318 = vmatpush.xpose.msra.mxu0 0.0
    %1319 = vmatpush.xpose.msra.mxu0 0.0
    %1320 = vmatpush.xpose.msra.mxu0 0.0
    %1321 = vmatpush.xpose.msra.mxu0 0.0
    %1322 = vmatpush.xpose.msra.mxu0 0.0
    %1323 = vmatpush.xpose.msra.mxu0 0.0
    %1324 = vmatpush.xpose.msra.mxu0 0.0
    %1325 = vmatpush.xpose.msra.mxu0 %v1308
    %1326 = vmatmul.f32.gmra.mxu0 %v1306
    %v1327 = vpop.f32.mrf.mxu0
    %v1328 = vadd.f32 0.0, %v1327
    %1329 = vdwg.mxu0
    %1330 = vrot.lane.b32.xlu0 %v1146, 120
    %v1331 = vpop.permute.xlu0 %1330
    %1332 = vrot.lane.b32.xlu0 %v1146, 88
    %v1333 = vpop.permute.xlu0 %1332
    %v1334 = vsel %vm150, %v1331, 0
    %v1336 = vsel %vm150, %v1333, 0
    %1338 = vmatpush.xpose.msra.mxu0 0.0
    %1339 = vmatpush.xpose.msra.mxu0 0.0
    %1340 = vmatpush.xpose.msra.mxu0 0.0
    %1341 = vmatpush.xpose.msra.mxu0 0.0
    %1342 = vmatpush.xpose.msra.mxu0 0.0
    %1343 = vmatpush.xpose.msra.mxu0 0.0
    %1344 = vmatpush.xpose.msra.mxu0 0.0
    %1345 = vmatpush.xpose.msra.mxu0 0.0
    %1346 = vmatpush.xpose.msra.mxu0 0.0
    %1347 = vmatpush.xpose.msra.mxu0 0.0
    %1348 = vmatpush.xpose.msra.mxu0 0.0
    %1349 = vmatpush.xpose.msra.mxu0 0.0
    %1350 = vmatpush.xpose.msra.mxu0 0.0
    %1351 = vmatpush.xpose.msra.mxu0 0.0
    %1352 = vmatpush.xpose.msra.mxu0 0.0
    %1353 = vmatpush.xpose.msra.mxu0 %v1336
    %1354 = vmatmul.f32.gmra.mxu0 %v1334
    %v1355 = vpop.f32.mrf.mxu0
    %v1356 = vadd.f32 0.0, %v1355
    %1357 = vdwg.mxu0
    %v1358 = vsel %vm150, %v1328, -inf
    %1359 = vmax.xlane.f32.xlu0 %v1358
    %v1360 = vpop.xlane.xlu0 %1359
    %v1361 = vsel %vm150, %v1356, -inf
    %1362 = vmax.xlane.f32.xlu0 %v1361
    %v1363 = vpop.xlane.xlu0 %1362
    %v1364 = vsub.f32 %v1328, %v1360
    %v1365 = vsub.f32 %v1356, %v1363
    %v1366 = vmul.f32 %v1364, 1.442695
    %v1367 = vpow.pop %v1366
    %v1368 = vmul.f32 %v1365, 1.442695
    %v1369 = vpow.pop %v1368
    %v1370 = vsel %vm150, %v1367, 0.0
    %1371 = vadd.xlane.f32.xlu0 %v1370
    %v1372 = vpop.xlane.xlu0 %1371
    %v1373 = vsel %vm150, %v1369, 0.0
    %1374 = vadd.xlane.f32.xlu0 %v1373
    %v1375 = vpop.xlane.xlu0 %1374
    %v1376 = vrcp.pop %v1372
    %v1377 = vmul.f32 %v1372, %v1376
    %v1378 = vsub.f32 1.0, %v1377
    %v1379 = vmul.f32 %v1376, %v1378
    %v1380 = vadd.f32 %v1376, %v1379
    %vm1381 = vweird.f32 %v1372
    %vm1382 = vweird.f32 %v1376
    %vm1383 = vmor %vm1381, %vm1382
    %v1384 = vsel %vm1383, %v1376, %v1380
    %v1385 = vand.u32 2147483647, %v1372
    %vm1386 = vcmp.eq.f32.partialorder %v1385, 8.507059e+37
    %v1387 = vand.u32 %v1372, 2147483648
    %v1388 = vor.u32 1.1754944e-38, %v1387
    %v1389 = vsel %vm1386, %v1388, %v1384
    %v1390 = vrcp.pop %v1375
    %v1391 = vmul.f32 %v1375, %v1390
    %v1392 = vsub.f32 1.0, %v1391
    %v1393 = vmul.f32 %v1390, %v1392
    %v1394 = vadd.f32 %v1390, %v1393
    %vm1395 = vweird.f32 %v1375
    %vm1396 = vweird.f32 %v1390
    %vm1397 = vmor %vm1395, %vm1396
    %v1398 = vsel %vm1397, %v1390, %v1394
    %v1399 = vand.u32 2147483647, %v1375
    %vm1400 = vcmp.eq.f32.partialorder %v1399, 8.507059e+37
    %v1401 = vand.u32 %v1375, 2147483648
    %v1402 = vor.u32 1.1754944e-38, %v1401
    %v1403 = vsel %vm1400, %v1402, %v1398
    %v1404 = vmul.f32 %v1367, %v1389
    %v1405 = vmul.f32 %v1369, %v1403
    %1406 = vrot.lane.b32.xlu0 %v1143, 56
    %v1407 = vpop.permute.xlu0 %1406
    %v1410 = vsel %vm150, %v1404, 0
    %1412 = vmatpush.msra.mxu0 0.0
    %1413 = vmatpush.msra.mxu0 0.0
    %1414 = vmatpush.msra.mxu0 0.0
    %1415 = vmatpush.msra.mxu0 0.0
    %1416 = vmatpush.msra.mxu0 0.0
    %1417 = vmatpush.msra.mxu0 0.0
    %1418 = vmatpush.msra.mxu0 0.0
    %1419 = vmatpush.msra.mxu0 0.0
    %1420 = vmatpush.msra.mxu0 0.0
    %1421 = vmatpush.msra.mxu0 0.0
    %1422 = vmatpush.msra.mxu0 0.0
    %1423 = vmatpush.msra.mxu0 0.0
    %1424 = vmatpush.msra.mxu0 0.0
    %1425 = vmatpush.msra.mxu0 0.0
    %1426 = vmatpush.msra.mxu0 0.0
    %1427 = vmatpush.msra.mxu0 %v1407
    %1428 = vmatmul.f32.gmra.mxu0 %v1410
    %v1429 = vpop.f32.mrf.mxu0
    %v1430 = vadd.f32 0.0, %v1429
    %1431 = vdwg.mxu0
    %1432 = vrot.lane.b32.xlu0 %v1146, 56
    %v1433 = vpop.permute.xlu0 %1432
    %v1436 = vsel %vm150, %v1405, 0
    %1438 = vmatpush.msra.mxu0 0.0
    %1439 = vmatpush.msra.mxu0 0.0
    %1440 = vmatpush.msra.mxu0 0.0
    %1441 = vmatpush.msra.mxu0 0.0
    %1442 = vmatpush.msra.mxu0 0.0
    %1443 = vmatpush.msra.mxu0 0.0
    %1444 = vmatpush.msra.mxu0 0.0
    %1445 = vmatpush.msra.mxu0 0.0
    %1446 = vmatpush.msra.mxu0 0.0
    %1447 = vmatpush.msra.mxu0 0.0
    %1448 = vmatpush.msra.mxu0 0.0
    %1449 = vmatpush.msra.mxu0 0.0
    %1450 = vmatpush.msra.mxu0 0.0
    %1451 = vmatpush.msra.mxu0 0.0
    %1452 = vmatpush.msra.mxu0 0.0
    %1453 = vmatpush.msra.mxu0 %v1433
    %1454 = vmatmul.f32.gmra.mxu0 %v1436
    %v1455 = vpop.f32.mrf.mxu0
    %v1456 = vadd.f32 0.0, %v1455
    %1457 = vdwg.mxu0
    %1458 = vrot.lane.b32.xlu0 %v1143, 112
    %v1459 = vpop.permute.xlu0 %1458
    %1460 = vrot.lane.b32.xlu0 %v1143, 80
    %v1461 = vpop.permute.xlu0 %1460
    %v1462 = vsel %vm150, %v1459, 0
    %v1464 = vsel %vm150, %v1461, 0
    %1466 = vmatpush.xpose.msra.mxu0 0.0
    %1467 = vmatpush.xpose.msra.mxu0 0.0
    %1468 = vmatpush.xpose.msra.mxu0 0.0
    %1469 = vmatpush.xpose.msra.mxu0 0.0
    %1470 = vmatpush.xpose.msra.mxu0 0.0
    %1471 = vmatpush.xpose.msra.mxu0 0.0
    %1472 = vmatpush.xpose.msra.mxu0 0.0
    %1473 = vmatpush.xpose.msra.mxu0 0.0
    %1474 = vmatpush.xpose.msra.mxu0 0.0
    %1475 = vmatpush.xpose.msra.mxu0 0.0
    %1476 = vmatpush.xpose.msra.mxu0 0.0
    %1477 = vmatpush.xpose.msra.mxu0 0.0
    %1478 = vmatpush.xpose.msra.mxu0 0.0
    %1479 = vmatpush.xpose.msra.mxu0 0.0
    %1480 = vmatpush.xpose.msra.mxu0 0.0
    %1481 = vmatpush.xpose.msra.mxu0 %v1464
    %1482 = vmatmul.f32.gmra.mxu0 %v1462
    %v1483 = vpop.f32.mrf.mxu0
    %v1484 = vadd.f32 0.0, %v1483
    %1485 = vdwg.mxu0
    %1486 = vrot.lane.b32.xlu0 %v1146, 112
    %v1487 = vpop.permute.xlu0 %1486
    %1488 = vrot.lane.b32.xlu0 %v1146, 80
    %v1489 = vpop.permute.xlu0 %1488
    %v1490 = vsel %vm150, %v1487, 0
    %v1492 = vsel %vm150, %v1489, 0
    %1494 = vmatpush.xpose.msra.mxu0 0.0
    %1495 = vmatpush.xpose.msra.mxu0 0.0
    %1496 = vmatpush.xpose.msra.mxu0 0.0
    %1497 = vmatpush.xpose.msra.mxu0 0.0
    %1498 = vmatpush.xpose.msra.mxu0 0.0
    %1499 = vmatpush.xpose.msra.mxu0 0.0
    %1500 = vmatpush.xpose.msra.mxu0 0.0
    %1501 = vmatpush.xpose.msra.mxu0 0.0
    %1502 = vmatpush.xpose.msra.mxu0 0.0
    %1503 = vmatpush.xpose.msra.mxu0 0.0
    %1504 = vmatpush.xpose.msra.mxu0 0.0
    %1505 = vmatpush.xpose.msra.mxu0 0.0
    %1506 = vmatpush.xpose.msra.mxu0 0.0
    %1507 = vmatpush.xpose.msra.mxu0 0.0
    %1508 = vmatpush.xpose.msra.mxu0 0.0
    %1509 = vmatpush.xpose.msra.mxu0 %v1492
    %1510 = vmatmul.f32.gmra.mxu0 %v1490
    %v1511 = vpop.f32.mrf.mxu0
    %v1512 = vadd.f32 0.0, %v1511
    %1513 = vdwg.mxu0
    %v1514 = vsel %vm150, %v1484, -inf
    %1515 = vmax.xlane.f32.xlu0 %v1514
    %v1516 = vpop.xlane.xlu0 %1515
    %v1517 = vsel %vm150, %v1512, -inf
    %1518 = vmax.xlane.f32.xlu0 %v1517
    %v1519 = vpop.xlane.xlu0 %1518
    %v1520 = vsub.f32 %v1484, %v1516
    %v1521 = vsub.f32 %v1512, %v1519
    %v1522 = vmul.f32 %v1520, 1.442695
    %v1523 = vpow.pop %v1522
    %v1524 = vmul.f32 %v1521, 1.442695
    %v1525 = vpow.pop %v1524
    %v1526 = vsel %vm150, %v1523, 0.0
    %1527 = vadd.xlane.f32.xlu0 %v1526
    %v1528 = vpop.xlane.xlu0 %1527
    %v1529 = vsel %vm150, %v1525, 0.0
    %1530 = vadd.xlane.f32.xlu0 %v1529
    %v1531 = vpop.xlane.xlu0 %1530
    %v1532 = vrcp.pop %v1528
    %v1533 = vmul.f32 %v1528, %v1532
    %v1534 = vsub.f32 1.0, %v1533
    %v1535 = vmul.f32 %v1532, %v1534
    %v1536 = vadd.f32 %v1532, %v1535
    %vm1537 = vweird.f32 %v1528
    %vm1538 = vweird.f32 %v1532
    %vm1539 = vmor %vm1537, %vm1538
    %v1540 = vsel %vm1539, %v1532, %v1536
    %v1541 = vand.u32 2147483647, %v1528
    %vm1542 = vcmp.eq.f32.partialorder %v1541, 8.507059e+37
    %v1543 = vand.u32 %v1528, 2147483648
    %v1544 = vor.u32 1.1754944e-38, %v1543
    %v1545 = vsel %vm1542, %v1544, %v1540
    %v1546 = vrcp.pop %v1531
    %v1547 = vmul.f32 %v1531, %v1546
    %v1548 = vsub.f32 1.0, %v1547
    %v1549 = vmul.f32 %v1546, %v1548
    %v1550 = vadd.f32 %v1546, %v1549
    %vm1551 = vweird.f32 %v1531
    %vm1552 = vweird.f32 %v1546
    %vm1553 = vmor %vm1551, %vm1552
    %v1554 = vsel %vm1553, %v1546, %v1550
    %v1555 = vand.u32 2147483647, %v1531
    %vm1556 = vcmp.eq.f32.partialorder %v1555, 8.507059e+37
    %v1557 = vand.u32 %v1531, 2147483648
    %v1558 = vor.u32 1.1754944e-38, %v1557
    %v1559 = vsel %vm1556, %v1558, %v1554
    %v1560 = vmul.f32 %v1523, %v1545
    %v1561 = vmul.f32 %v1525, %v1559
    %1562 = vrot.lane.b32.xlu0 %v1143, 48
    %v1563 = vpop.permute.xlu0 %1562
    %v1566 = vsel %vm150, %v1560, 0
    %1568 = vmatpush.msra.mxu0 0.0
    %1569 = vmatpush.msra.mxu0 0.0
    %1570 = vmatpush.msra.mxu0 0.0
    %1571 = vmatpush.msra.mxu0 0.0
    %1572 = vmatpush.msra.mxu0 0.0
    %1573 = vmatpush.msra.mxu0 0.0
    %1574 = vmatpush.msra.mxu0 0.0
    %1575 = vmatpush.msra.mxu0 0.0
    %1576 = vmatpush.msra.mxu0 0.0
    %1577 = vmatpush.msra.mxu0 0.0
    %1578 = vmatpush.msra.mxu0 0.0
    %1579 = vmatpush.msra.mxu0 0.0
    %1580 = vmatpush.msra.mxu0 0.0
    %1581 = vmatpush.msra.mxu0 0.0
    %1582 = vmatpush.msra.mxu0 0.0
    %1583 = vmatpush.msra.mxu0 %v1563
    %1584 = vmatmul.f32.gmra.mxu0 %v1566
    %v1585 = vpop.f32.mrf.mxu0
    %v1586 = vadd.f32 0.0, %v1585
    %1587 = vdwg.mxu0
    %1588 = vrot.lane.b32.xlu0 %v1146, 48
    %v1589 = vpop.permute.xlu0 %1588
    %v1592 = vsel %vm150, %v1561, 0
    %1594 = vmatpush.msra.mxu0 0.0
    %1595 = vmatpush.msra.mxu0 0.0
    %1596 = vmatpush.msra.mxu0 0.0
    %1597 = vmatpush.msra.mxu0 0.0
    %1598 = vmatpush.msra.mxu0 0.0
    %1599 = vmatpush.msra.mxu0 0.0
    %1600 = vmatpush.msra.mxu0 0.0
    %1601 = vmatpush.msra.mxu0 0.0
    %1602 = vmatpush.msra.mxu0 0.0
    %1603 = vmatpush.msra.mxu0 0.0
    %1604 = vmatpush.msra.mxu0 0.0
    %1605 = vmatpush.msra.mxu0 0.0
    %1606 = vmatpush.msra.mxu0 0.0
    %1607 = vmatpush.msra.mxu0 0.0
    %1608 = vmatpush.msra.mxu0 0.0
    %1609 = vmatpush.msra.mxu0 %v1589
    %1610 = vmatmul.f32.gmra.mxu0 %v1592
    %v1611 = vpop.f32.mrf.mxu0
    %v1612 = vadd.f32 0.0, %v1611
    %1613 = vdwg.mxu0
    %1614 = vrot.lane.b32.xlu0 %v1143, 104
    %v1615 = vpop.permute.xlu0 %1614
    %1616 = vrot.lane.b32.xlu0 %v1143, 72
    %v1617 = vpop.permute.xlu0 %1616
    %v1618 = vsel %vm150, %v1615, 0
    %v1620 = vsel %vm150, %v1617, 0
    %1622 = vmatpush.xpose.msra.mxu0 0.0
    %1623 = vmatpush.xpose.msra.mxu0 0.0
    %1624 = vmatpush.xpose.msra.mxu0 0.0
    %1625 = vmatpush.xpose.msra.mxu0 0.0
    %1626 = vmatpush.xpose.msra.mxu0 0.0
    %1627 = vmatpush.xpose.msra.mxu0 0.0
    %1628 = vmatpush.xpose.msra.mxu0 0.0
    %1629 = vmatpush.xpose.msra.mxu0 0.0
    %1630 = vmatpush.xpose.msra.mxu0 0.0
    %1631 = vmatpush.xpose.msra.mxu0 0.0
    %1632 = vmatpush.xpose.msra.mxu0 0.0
    %1633 = vmatpush.xpose.msra.mxu0 0.0
    %1634 = vmatpush.xpose.msra.mxu0 0.0
    %1635 = vmatpush.xpose.msra.mxu0 0.0
    %1636 = vmatpush.xpose.msra.mxu0 0.0
    %1637 = vmatpush.xpose.msra.mxu0 %v1620
    %1638 = vmatmul.f32.gmra.mxu0 %v1618
    %v1639 = vpop.f32.mrf.mxu0
    %v1640 = vadd.f32 0.0, %v1639
    %1641 = vdwg.mxu0
    %1642 = vrot.lane.b32.xlu0 %v1146, 104
    %v1643 = vpop.permute.xlu0 %1642
    %1644 = vrot.lane.b32.xlu0 %v1146, 72
    %v1645 = vpop.permute.xlu0 %1644
    %v1646 = vsel %vm150, %v1643, 0
    %v1648 = vsel %vm150, %v1645, 0
    %1650 = vmatpush.xpose.msra.mxu0 0.0
    %1651 = vmatpush.xpose.msra.mxu0 0.0
    %1652 = vmatpush.xpose.msra.mxu0 0.0
    %1653 = vmatpush.xpose.msra.mxu0 0.0
    %1654 = vmatpush.xpose.msra.mxu0 0.0
    %1655 = vmatpush.xpose.msra.mxu0 0.0
    %1656 = vmatpush.xpose.msra.mxu0 0.0
    %1657 = vmatpush.xpose.msra.mxu0 0.0
    %1658 = vmatpush.xpose.msra.mxu0 0.0
    %1659 = vmatpush.xpose.msra.mxu0 0.0
    %1660 = vmatpush.xpose.msra.mxu0 0.0
    %1661 = vmatpush.xpose.msra.mxu0 0.0
    %1662 = vmatpush.xpose.msra.mxu0 0.0
    %1663 = vmatpush.xpose.msra.mxu0 0.0
    %1664 = vmatpush.xpose.msra.mxu0 0.0
    %1665 = vmatpush.xpose.msra.mxu0 %v1648
    %1666 = vmatmul.f32.gmra.mxu0 %v1646
    %v1667 = vpop.f32.mrf.mxu0
    %v1668 = vadd.f32 0.0, %v1667
    %1669 = vdwg.mxu0
    %v1670 = vsel %vm150, %v1640, -inf
    %1671 = vmax.xlane.f32.xlu0 %v1670
    %v1672 = vpop.xlane.xlu0 %1671
    %v1673 = vsel %vm150, %v1668, -inf
    %1674 = vmax.xlane.f32.xlu0 %v1673
    %v1675 = vpop.xlane.xlu0 %1674
    %v1676 = vsub.f32 %v1640, %v1672
    %v1677 = vsub.f32 %v1668, %v1675
    %v1678 = vmul.f32 %v1676, 1.442695
    %v1679 = vpow.pop %v1678
    %v1680 = vmul.f32 %v1677, 1.442695
    %v1681 = vpow.pop %v1680
    %v1682 = vsel %vm150, %v1679, 0.0
    %1683 = vadd.xlane.f32.xlu0 %v1682
    %v1684 = vpop.xlane.xlu0 %1683
    %v1685 = vsel %vm150, %v1681, 0.0
    %1686 = vadd.xlane.f32.xlu0 %v1685
    %v1687 = vpop.xlane.xlu0 %1686
    %v1688 = vrcp.pop %v1684
    %v1689 = vmul.f32 %v1684, %v1688
    %v1690 = vsub.f32 1.0, %v1689
    %v1691 = vmul.f32 %v1688, %v1690
    %v1692 = vadd.f32 %v1688, %v1691
    %vm1693 = vweird.f32 %v1684
    %vm1694 = vweird.f32 %v1688
    %vm1695 = vmor %vm1693, %vm1694
    %v1696 = vsel %vm1695, %v1688, %v1692
    %v1697 = vand.u32 2147483647, %v1684
    %vm1698 = vcmp.eq.f32.partialorder %v1697, 8.507059e+37
    %v1699 = vand.u32 %v1684, 2147483648
    %v1700 = vor.u32 1.1754944e-38, %v1699
    %v1701 = vsel %vm1698, %v1700, %v1696
    %v1702 = vrcp.pop %v1687
    %v1703 = vmul.f32 %v1687, %v1702
    %v1704 = vsub.f32 1.0, %v1703
    %v1705 = vmul.f32 %v1702, %v1704
    %v1706 = vadd.f32 %v1702, %v1705
    %vm1707 = vweird.f32 %v1687
    %vm1708 = vweird.f32 %v1702
    %vm1709 = vmor %vm1707, %vm1708
    %v1710 = vsel %vm1709, %v1702, %v1706
    %v1711 = vand.u32 2147483647, %v1687
    %vm1712 = vcmp.eq.f32.partialorder %v1711, 8.507059e+37
    %v1713 = vand.u32 %v1687, 2147483648
    %v1714 = vor.u32 1.1754944e-38, %v1713
    %v1715 = vsel %vm1712, %v1714, %v1710
    %v1716 = vmul.f32 %v1679, %v1701
    %v1717 = vmul.f32 %v1681, %v1715
    %1718 = vrot.lane.b32.xlu0 %v1143, 40
    %v1719 = vpop.permute.xlu0 %1718
    %v1722 = vsel %vm150, %v1716, 0
    %1724 = vmatpush.msra.mxu0 0.0
    %1725 = vmatpush.msra.mxu0 0.0
    %1726 = vmatpush.msra.mxu0 0.0
    %1727 = vmatpush.msra.mxu0 0.0
    %1728 = vmatpush.msra.mxu0 0.0
    %1729 = vmatpush.msra.mxu0 0.0
    %1730 = vmatpush.msra.mxu0 0.0
    %1731 = vmatpush.msra.mxu0 0.0
    %1732 = vmatpush.msra.mxu0 0.0
    %1733 = vmatpush.msra.mxu0 0.0
    %1734 = vmatpush.msra.mxu0 0.0
    %1735 = vmatpush.msra.mxu0 0.0
    %1736 = vmatpush.msra.mxu0 0.0
    %1737 = vmatpush.msra.mxu0 0.0
    %1738 = vmatpush.msra.mxu0 0.0
    %1739 = vmatpush.msra.mxu0 %v1719
    %1740 = vmatmul.f32.gmra.mxu0 %v1722
    %v1741 = vpop.f32.mrf.mxu0
    %v1742 = vadd.f32 0.0, %v1741
    %1743 = vdwg.mxu0
    %1744 = vrot.lane.b32.xlu0 %v1146, 40
    %v1745 = vpop.permute.xlu0 %1744
    %v1748 = vsel %vm150, %v1717, 0
    %1750 = vmatpush.msra.mxu0 0.0
    %1751 = vmatpush.msra.mxu0 0.0
    %1752 = vmatpush.msra.mxu0 0.0
    %1753 = vmatpush.msra.mxu0 0.0
    %1754 = vmatpush.msra.mxu0 0.0
    %1755 = vmatpush.msra.mxu0 0.0
    %1756 = vmatpush.msra.mxu0 0.0
    %1757 = vmatpush.msra.mxu0 0.0
    %1758 = vmatpush.msra.mxu0 0.0
    %1759 = vmatpush.msra.mxu0 0.0
    %1760 = vmatpush.msra.mxu0 0.0
    %1761 = vmatpush.msra.mxu0 0.0
    %1762 = vmatpush.msra.mxu0 0.0
    %1763 = vmatpush.msra.mxu0 0.0
    %1764 = vmatpush.msra.mxu0 0.0
    %1765 = vmatpush.msra.mxu0 %v1745
    %1766 = vmatmul.f32.gmra.mxu0 %v1748
    %v1767 = vpop.f32.mrf.mxu0
    %v1768 = vadd.f32 0.0, %v1767
    %1769 = vdwg.mxu0
    %1772 = vrot.lane.b32.xlu0 %v1430, 8
    %v1773 = vpop.permute.xlu0 %1772
    %1774 = vrot.lane.b32.xlu0 %v1456, 8
    %v1775 = vpop.permute.xlu0 %1774
    %1780 = vrot.lane.b32.xlu0 %v1586, 16
    %v1781 = vpop.permute.xlu0 %1780
    %1782 = vrot.lane.b32.xlu0 %v1612, 16
    %v1783 = vpop.permute.xlu0 %1782
    %1788 = vrot.lane.b32.xlu0 %v1742, 24
    %v1789 = vpop.permute.xlu0 %1788
    %1790 = vrot.lane.b32.xlu0 %v1768, 24
    %v1791 = vpop.permute.xlu0 %1790
    %v1794 = vsel %vm150, %v1274, %v1773
    %v1795 = vsel %vm150, %v1300, %v1775
    %v1796 = vsel %vm796, %v1794, %v1781
    %v1797 = vsel %vm796, %v1795, %v1783
    %v1798 = vsel %vm799, %v1796, %v1789
    %v1799 = vsel %vm799, %v1797, %v1791
    %s1800 = scalar_lea.vmem %s2, 32
    %v1801 = vld [vmem:[%s1800] sm:$0xff]
    %v1802 = vld [vmem:[%s1800 + $0x8] sm:$0xff]
    %v1803 = vld [vmem:[%s1800 + $0x10] sm:$0xff]
    %v1804 = vld [vmem:[%s1800 + $0x18] sm:$0xff]
    %s1805 = scalar_lea.vmem %s3, 1
    %v1806 = vld [vmem:[%s1805] sm:$0x1]
    %v1808 = vperm.slane %v1806, 0
    %v1811 = vsel %vm117, %v1798, 0
    %v1814 = vsel %vm117, %v1799, 0
    %1816 = vmatpush.msra.mxu0 0.0
    %1817 = vmatpush.msra.mxu0 0.0
    %1818 = vmatpush.msra.mxu0 0.0
    %1819 = vmatpush.msra.mxu0 0.0
    %1820 = vmatpush.msra.mxu0 0.0
    %1821 = vmatpush.msra.mxu0 0.0
    %1822 = vmatpush.msra.mxu0 0.0
    %1823 = vmatpush.msra.mxu0 0.0
    %1824 = vmatpush.msra.mxu0 0.0
    %1825 = vmatpush.msra.mxu0 0.0
    %1826 = vmatpush.msra.mxu0 0.0
    %1827 = vmatpush.msra.mxu0 0.0
    %1828 = vmatpush.msra.mxu0 %v1804
    %1829 = vmatpush.msra.mxu0 %v1803
    %1830 = vmatpush.msra.mxu0 %v1802
    %1831 = vmatpush.msra.mxu0 %v1801
    %1832 = vmatmul.f32.gmra.mxu0 %v1811
    %v1833 = vpop.f32.mrf.mxu0
    %v1834 = vadd.f32 %v1808, %v1833
    %1835 = vmatmul.f32.gmra.mxu0 %v1814
    %v1836 = vpop.f32.mrf.mxu0
    %v1837 = vadd.f32 %v1808, %v1836
    %1838 = vdwg.mxu0
    %v1839 = vadd.f32 %v1112, %v1834
    %v1840 = vadd.f32 %v1113, %v1837
    %s1841 = scalar_lea.vmem [#allocation5], 1
    %v1842 = vld [vmem:[%s1841] sm:$0x1]
    %s1843 = scalar_lea.vmem [#allocation7], 1
    %v1844 = vld [vmem:[%s1843] sm:$0x1]
    %v1845 = vsel %vm117, %v1839, 0.0
    %1846 = vadd.xlane.f32.xlu0 %v1845
    %v1847 = vpop.xlane.xlu0 %1846
    %v1848 = vsel %vm117, %v1840, 0.0
    %1849 = vadd.xlane.f32.xlu0 %v1848
    %v1850 = vpop.xlane.xlu0 %1849
    %v1851 = vmul.f32 %v1847, %v855
    %v1852 = vmul.f32 %v1850, %v855
    %v1853 = vsub.f32 %v1839, %v1851
    %v1854 = vsub.f32 %v1840, %v1852
    %v1855 = vmul.f32 %v1853, %v1853
    %v1856 = vmul.f32 %v1854, %v1854
    %v1857 = vsel %vm117, %v1855, 0.0
    %1858 = vadd.xlane.f32.xlu0 %v1857
    %v1859 = vpop.xlane.xlu0 %1858
    %v1860 = vsel %vm117, %v1856, 0.0
    %1861 = vadd.xlane.f32.xlu0 %v1860
    %v1862 = vpop.xlane.xlu0 %1861
    %v1863 = vmul.f32 %v1859, %v874
    %v1864 = vmul.f32 %v1862, %v874
    %v1865 = vrsqrt.pop %v1863
    %v1866 = vmul.f32 %v1865, %v1863
    %v1867 = vmul.f32 %v1866, %v1865
    %v1868 = vmul.f32 0.5, %v1867
    %v1869 = vsub.f32 1.5, %v1868
    %v1870 = vmul.f32 %v1865, %v1869
    %v1871 = vmul.f32 %v1863, %v1870
    %vm1872 = vcmp.eq.f32.partialorder %v1863, inf
    %v1873 = vsel %vm1872, %v1863, %v1871
    %vm1874 = vcmp.eq.f32.partialorder %v1863, 0.0
    %v1875 = vand.u32 %v1863, 2147483648
    %v1876 = vsel %vm1874, %v1875, %v1873
    %v1877 = vrsqrt.pop %v1864
    %v1878 = vmul.f32 %v1877, %v1864
    %v1879 = vmul.f32 %v1878, %v1877
    %v1880 = vmul.f32 0.5, %v1879
    %v1881 = vsub.f32 1.5, %v1880
    %v1882 = vmul.f32 %v1877, %v1881
    %v1883 = vmul.f32 %v1864, %v1882
    %vm1884 = vcmp.eq.f32.partialorder %v1864, inf
    %v1885 = vsel %vm1884, %v1864, %v1883
    %vm1886 = vcmp.eq.f32.partialorder %v1864, 0.0
    %v1887 = vand.u32 %v1864, 2147483648
    %v1888 = vsel %vm1886, %v1887, %v1885
    %v1889 = vadd.f32 %v1876, 1e-06
    %v1890 = vadd.f32 %v1888, 1e-06
    %v1891 = vrcp.pop %v1889
    %v1892 = vmul.f32 %v1889, %v1891
    %v1893 = vsub.f32 1.0, %v1892
    %v1894 = vmul.f32 %v1891, %v1893
    %v1895 = vadd.f32 %v1891, %v1894
    %vm1896 = vweird.f32 %v1889
    %vm1897 = vweird.f32 %v1891
    %vm1898 = vmor %vm1896, %vm1897
    %v1899 = vsel %vm1898, %v1891, %v1895
    %v1900 = vand.u32 2147483647, %v1889
    %vm1901 = vcmp.eq.f32.partialorder %v1900, 8.507059e+37
    %v1902 = vand.u32 %v1889, 2147483648
    %v1903 = vor.u32 1.1754944e-38, %v1902
    %v1904 = vsel %vm1901, %v1903, %v1899
    %v1905 = vrcp.pop %v1890
    %v1906 = vmul.f32 %v1890, %v1905
    %v1907 = vsub.f32 1.0, %v1906
    %v1908 = vmul.f32 %v1905, %v1907
    %v1909 = vadd.f32 %v1905, %v1908
    %vm1910 = vweird.f32 %v1890
    %vm1911 = vweird.f32 %v1905
    %vm1912 = vmor %vm1910, %vm1911
    %v1913 = vsel %vm1912, %v1905, %v1909
    %v1914 = vand.u32 2147483647, %v1890
    %vm1915 = vcmp.eq.f32.partialorder %v1914, 8.507059e+37
    %v1916 = vand.u32 %v1890, 2147483648
    %v1917 = vor.u32 1.1754944e-38, %v1916
    %v1918 = vsel %vm1915, %v1917, %v1913
    %v1920 = vperm.slane %v1842, 0
    %v1922 = vmul.f32 %v1920, %v1853
    %v1923 = vmul.f32 %v1920, %v1854
    %v1924 = vmul.f32 %v1922, %v1904
    %v1925 = vmul.f32 %v1923, %v1918
    %v1927 = vperm.slane %v1844, 0
    %v1929 = vadd.f32 %v1924, %v1927
    %v1930 = vadd.f32 %v1925, %v1927
    %s1931 = scalar_lea.vmem %s6, 32
    %v1932 = vld [vmem:[%s1931] sm:$0xff]
    %v1933 = vld [vmem:[%s1931 + $0x8] sm:$0xff]
    %v1934 = vld [vmem:[%s1931 + $0x10] sm:$0xff]
    %v1935 = vld [vmem:[%s1931 + $0x18] sm:$0xff]
    %s1936 = scalar_lea.vmem %s7, 1
    %v1937 = vld [vmem:[%s1936] sm:$0x1]
    %v1939 = vperm.slane %v1937, 0
    %v1942 = vsel %vm117, %v1929, 0
    %v1945 = vsel %vm117, %v1930, 0
    %1947 = vmatpush.msra.mxu0 0.0
    %1948 = vmatpush.msra.mxu0 0.0
    %1949 = vmatpush.msra.mxu0 0.0
    %1950 = vmatpush.msra.mxu0 0.0
    %1951 = vmatpush.msra.mxu0 0.0
    %1952 = vmatpush.msra.mxu0 0.0
    %1953 = vmatpush.msra.mxu0 0.0
    %1954 = vmatpush.msra.mxu0 0.0
    %1955 = vmatpush.msra.mxu0 0.0
    %1956 = vmatpush.msra.mxu0 0.0
    %1957 = vmatpush.msra.mxu0 0.0
    %1958 = vmatpush.msra.mxu0 0.0
    %1959 = vmatpush.msra.mxu0 %v1935
    %1960 = vmatpush.msra.mxu0 %v1934
    %1961 = vmatpush.msra.mxu0 %v1933
    %1962 = vmatpush.msra.mxu0 %v1932
    %1963 = vmatmul.f32.gmra.mxu0 %v1942
    %v1964 = vpop.f32.mrf.mxu0
    %v1965 = vadd.f32 %v1939, %v1964
    %1966 = vmatmul.f32.gmra.mxu0 %v1945
    %v1967 = vpop.f32.mrf.mxu0
    %v1968 = vadd.f32 %v1939, %v1967
    %1969 = vdwg.mxu0
    %v1970 = vmax.f32 %v1965, 0.0
    %v1971 = vmax.f32 %v1968, 0.0
    %s1972 = scalar_lea.vmem %s8, 64
    %v1973 = vld [vmem:[%s1972] sm:$0xff]
    %v1974 = vld [vmem:[%s1972 + $0x8] sm:$0xff]
    %v1975 = vld [vmem:[%s1972 + $0x10] sm:$0xff]
    %v1976 = vld [vmem:[%s1972 + $0x18] sm:$0xff]
    %v1977 = vld [vmem:[%s1972 + $0x20] sm:$0xff]
    %v1978 = vld [vmem:[%s1972 + $0x28] sm:$0xff]
    %v1979 = vld [vmem:[%s1972 + $0x30] sm:$0xff]
    %v1980 = vld [vmem:[%s1972 + $0x38] sm:$0xff]
    %s1981 = scalar_lea.vmem %s9, 1
    %v1982 = vld [vmem:[%s1981] sm:$0x1]
    %v1984 = vperm.slane %v1982, 0
    %v1987 = vsel %vm994, %v1970, 0
    %v1990 = vsel %vm994, %v1971, 0
    %1992 = vmatpush.msra.mxu0 0.0
    %1993 = vmatpush.msra.mxu0 0.0
    %1994 = vmatpush.msra.mxu0 0.0
    %1995 = vmatpush.msra.mxu0 0.0
    %1996 = vmatpush.msra.mxu0 0.0
    %1997 = vmatpush.msra.mxu0 0.0
    %1998 = vmatpush.msra.mxu0 0.0
    %1999 = vmatpush.msra.mxu0 0.0
    %2000 = vmatpush.msra.mxu0 %v1980
    %2001 = vmatpush.msra.mxu0 %v1979
    %2002 = vmatpush.msra.mxu0 %v1978
    %2003 = vmatpush.msra.mxu0 %v1977
    %2004 = vmatpush.msra.mxu0 %v1976
    %2005 = vmatpush.msra.mxu0 %v1975
    %2006 = vmatpush.msra.mxu0 %v1974
    %2007 = vmatpush.msra.mxu0 %v1973
    %2008 = vmatmul.f32.gmra.mxu0 %v1987
    %v2009 = vpop.f32.mrf.mxu0
    %v2010 = vadd.f32 %v1984, %v2009
    %2011 = vmatmul.f32.gmra.mxu0 %v1990
    %v2012 = vpop.f32.mrf.mxu0
    %v2013 = vadd.f32 %v1984, %v2012
    %2014 = vdwg.mxu0
    %v2015 = vadd.f32 %v1929, %v2010
    %v2016 = vadd.f32 %v1930, %v2013
    %s2017 = scalar_lea.vmem %s10, 1
    %v2018 = vld [vmem:[%s2017] sm:$0x1]
    %s2019 = scalar_lea.vmem [#allocation8], 1
    %v2020 = vld [vmem:[%s2019] sm:$0x1]
    %v2021 = vsel %vm117, %v2015, 0.0
    %2022 = vadd.xlane.f32.xlu0 %v2021
    %v2023 = vpop.xlane.xlu0 %2022
    %v2024 = vsel %vm117, %v2016, 0.0
    %2025 = vadd.xlane.f32.xlu0 %v2024
    %v2026 = vpop.xlane.xlu0 %2025
    %v2027 = vmul.f32 %v2023, %v855
    %v2028 = vmul.f32 %v2026, %v855
    %v2029 = vsub.f32 %v2015, %v2027
    %v2030 = vsub.f32 %v2016, %v2028
    %v2031 = vmul.f32 %v2029, %v2029
    %v2032 = vmul.f32 %v2030, %v2030
    %v2033 = vsel %vm117, %v2031, 0.0
    %2034 = vadd.xlane.f32.xlu0 %v2033
    %v2035 = vpop.xlane.xlu0 %2034
    %v2036 = vsel %vm117, %v2032, 0.0
    %2037 = vadd.xlane.f32.xlu0 %v2036
    %v2038 = vpop.xlane.xlu0 %2037
    %v2039 = vmul.f32 %v2035, %v874
    %v2040 = vmul.f32 %v2038, %v874
    %v2041 = vrsqrt.pop %v2039
    %v2042 = vmul.f32 %v2041, %v2039
    %v2043 = vmul.f32 %v2042, %v2041
    %v2044 = vmul.f32 0.5, %v2043
    %v2045 = vsub.f32 1.5, %v2044
    %v2046 = vmul.f32 %v2041, %v2045
    %v2047 = vmul.f32 %v2039, %v2046
    %vm2048 = vcmp.eq.f32.partialorder %v2039, inf
    %v2049 = vsel %vm2048, %v2039, %v2047
    %vm2050 = vcmp.eq.f32.partialorder %v2039, 0.0
    %v2051 = vand.u32 %v2039, 2147483648
    %v2052 = vsel %vm2050, %v2051, %v2049
    %v2053 = vrsqrt.pop %v2040
    %v2054 = vmul.f32 %v2053, %v2040
    %v2055 = vmul.f32 %v2054, %v2053
    %v2056 = vmul.f32 0.5, %v2055
    %v2057 = vsub.f32 1.5, %v2056
    %v2058 = vmul.f32 %v2053, %v2057
    %v2059 = vmul.f32 %v2040, %v2058
    %vm2060 = vcmp.eq.f32.partialorder %v2040, inf
    %v2061 = vsel %vm2060, %v2040, %v2059
    %vm2062 = vcmp.eq.f32.partialorder %v2040, 0.0
    %v2063 = vand.u32 %v2040, 2147483648
    %v2064 = vsel %vm2062, %v2063, %v2061
    %v2065 = vadd.f32 %v2052, 1e-06
    %v2066 = vadd.f32 %v2064, 1e-06
    %v2067 = vrcp.pop %v2065
    %v2068 = vmul.f32 %v2065, %v2067
    %v2069 = vsub.f32 1.0, %v2068
    %v2070 = vmul.f32 %v2067, %v2069
    %v2071 = vadd.f32 %v2067, %v2070
    %vm2072 = vweird.f32 %v2065
    %vm2073 = vweird.f32 %v2067
    %vm2074 = vmor %vm2072, %vm2073
    %v2075 = vsel %vm2074, %v2067, %v2071
    %v2076 = vand.u32 2147483647, %v2065
    %vm2077 = vcmp.eq.f32.partialorder %v2076, 8.507059e+37
    %v2078 = vand.u32 %v2065, 2147483648
    %v2079 = vor.u32 1.1754944e-38, %v2078
    %v2080 = vsel %vm2077, %v2079, %v2075
    %v2081 = vrcp.pop %v2066
    %v2082 = vmul.f32 %v2066, %v2081
    %v2083 = vsub.f32 1.0, %v2082
    %v2084 = vmul.f32 %v2081, %v2083
    %v2085 = vadd.f32 %v2081, %v2084
    %vm2086 = vweird.f32 %v2066
    %vm2087 = vweird.f32 %v2081
    %vm2088 = vmor %vm2086, %vm2087
    %v2089 = vsel %vm2088, %v2081, %v2085
    %v2090 = vand.u32 2147483647, %v2066
    %vm2091 = vcmp.eq.f32.partialorder %v2090, 8.507059e+37
    %v2092 = vand.u32 %v2066, 2147483648
    %v2093 = vor.u32 1.1754944e-38, %v2092
    %v2094 = vsel %vm2091, %v2093, %v2089
    %v2096 = vperm.slane %v2018, 0
    %v2098 = vmul.f32 %v2096, %v2029
    %v2099 = vmul.f32 %v2096, %v2030
    %v2100 = vmul.f32 %v2098, %v2080
    %v2101 = vmul.f32 %v2099, %v2094
    %v2103 = vperm.slane %v2020, 0
    %v2105 = vadd.f32 %v2100, %v2103
    %v2106 = vadd.f32 %v2101, %v2103
    %v2107 = vld [vmem:[%s12] sm:$0x1]
    %v2108 = vld [vmem:[%s13] sm:$0x1]
    %v2109 = vsel %vm117, %v2105, 0.0
    %2110 = vadd.xlane.f32.xlu0 %v2109
    %v2111 = vpop.xlane.xlu0 %2110
    %v2112 = vsel %vm117, %v2106, 0.0
    %2113 = vadd.xlane.f32.xlu0 %v2112
    %v2114 = vpop.xlane.xlu0 %2113
    %v2115 = vmul.f32 %v2111, %v855
    %v2116 = vmul.f32 %v2114, %v855
    %v2117 = vsub.f32 %v2105, %v2115
    %v2118 = vsub.f32 %v2106, %v2116
    %v2119 = vmul.f32 %v2117, %v2117
    %v2120 = vmul.f32 %v2118, %v2118
    %v2121 = vsel %vm117, %v2119, 0.0
    %2122 = vadd.xlane.f32.xlu0 %v2121
    %v2123 = vpop.xlane.xlu0 %2122
    %v2124 = vsel %vm117, %v2120, 0.0
    %2125 = vadd.xlane.f32.xlu0 %v2124
    %v2126 = vpop.xlane.xlu0 %2125
    %v2127 = vmul.f32 %v2123, %v874
    %v2128 = vmul.f32 %v2126, %v874
    %v2129 = vrsqrt.pop %v2127
    %v2130 = vmul.f32 %v2129, %v2127
    %v2131 = vmul.f32 %v2130, %v2129
    %v2132 = vmul.f32 0.5, %v2131
    %v2133 = vsub.f32 1.5, %v2132
    %v2134 = vmul.f32 %v2129, %v2133
    %v2135 = vmul.f32 %v2127, %v2134
    %vm2136 = vcmp.eq.f32.partialorder %v2127, inf
    %v2137 = vsel %vm2136, %v2127, %v2135
    %vm2138 = vcmp.eq.f32.partialorder %v2127, 0.0
    %v2139 = vand.u32 %v2127, 2147483648
    %v2140 = vsel %vm2138, %v2139, %v2137
    %v2141 = vrsqrt.pop %v2128
    %v2142 = vmul.f32 %v2141, %v2128
    %v2143 = vmul.f32 %v2142, %v2141
    %v2144 = vmul.f32 0.5, %v2143
    %v2145 = vsub.f32 1.5, %v2144
    %v2146 = vmul.f32 %v2141, %v2145
    %v2147 = vmul.f32 %v2128, %v2146
    %vm2148 = vcmp.eq.f32.partialorder %v2128, inf
    %v2149 = vsel %vm2148, %v2128, %v2147
    %vm2150 = vcmp.eq.f32.partialorder %v2128, 0.0
    %v2151 = vand.u32 %v2128, 2147483648
    %v2152 = vsel %vm2150, %v2151, %v2149
    %v2153 = vadd.f32 %v2140, 1e-06
    %v2154 = vadd.f32 %v2152, 1e-06
    %v2155 = vrcp.pop %v2153
    %v2156 = vmul.f32 %v2153, %v2155
    %v2157 = vsub.f32 1.0, %v2156
    %v2158 = vmul.f32 %v2155, %v2157
    %v2159 = vadd.f32 %v2155, %v2158
    %vm2160 = vweird.f32 %v2153
    %vm2161 = vweird.f32 %v2155
    %vm2162 = vmor %vm2160, %vm2161
    %v2163 = vsel %vm2162, %v2155, %v2159
    %v2164 = vand.u32 2147483647, %v2153
    %vm2165 = vcmp.eq.f32.partialorder %v2164, 8.507059e+37
    %v2166 = vand.u32 %v2153, 2147483648
    %v2167 = vor.u32 1.1754944e-38, %v2166
    %v2168 = vsel %vm2165, %v2167, %v2163
    %v2169 = vrcp.pop %v2154
    %v2170 = vmul.f32 %v2154, %v2169
    %v2171 = vsub.f32 1.0, %v2170
    %v2172 = vmul.f32 %v2169, %v2171
    %v2173 = vadd.f32 %v2169, %v2172
    %vm2174 = vweird.f32 %v2154
    %vm2175 = vweird.f32 %v2169
    %vm2176 = vmor %vm2174, %vm2175
    %v2177 = vsel %vm2176, %v2169, %v2173
    %v2178 = vand.u32 2147483647, %v2154
    %vm2179 = vcmp.eq.f32.partialorder %v2178, 8.507059e+37
    %v2180 = vand.u32 %v2154, 2147483648
    %v2181 = vor.u32 1.1754944e-38, %v2180
    %v2182 = vsel %vm2179, %v2181, %v2177
    %v2184 = vperm.slane %v2107, 0
    %v2186 = vmul.f32 %v2184, %v2117
    %v2187 = vmul.f32 %v2184, %v2118
    %v2188 = vmul.f32 %v2186, %v2168
    %v2189 = vmul.f32 %v2187, %v2182
    %v2191 = vperm.slane %v2108, 0
    %v2193 = vadd.f32 %v2188, %v2191
    %v2194 = vadd.f32 %v2189, %v2191
    %2195 = vst.msk [vmem:[#allocation10] sm:$0xff] %vm117, %v2193
    %2196 = vst.msk [vmem:[#allocation10 + $0x8] sm:$0xff] %vm117, %v2194
    // Predicated region
    $region74: #{tpu_custom_call.1} parent=1 // pred_check
      _
    $region75: #{tpu_custom_call.1} parent=1 // pred_check_branch
      %2198 = sbr.rel (0) target = $region77
    $region76: #{tpu_custom_call.1} parent=1 // pred_region
      %2200 = vsyncadd [#allocation4], 0
      %s2201 = sshll.u32 [#allocation10], 4
      %s2202 = int_to_ptr.vmem [resolvable:$true] %s2201
      %s2203 = sshll.u32 %s14, 4
      %s2204 = int_to_ptr.hbm [resolvable:$true] %s2203
      %2209 = dma.vmem_to_hbm [thread:$0]  %s2202, 256, %s2204, [#allocation4], 128, 128, 8
    $region77: #{tpu_custom_call.1} parent=1 // pred_fallthru
      _
    // Predicated region
    $region78: #{tpu_custom_call.1} parent=1 // pred_check
      _
    $region79: #{tpu_custom_call.1} parent=1 // pred_check_branch
      %2211 = sbr.rel (0) target = $region81
    $region80: #{tpu_custom_call.1} parent=1 // pred_region
      %2213 = dma.done [#allocation4], 256
    $region81: #{tpu_custom_call.1} parent=1 // pred_fallthru
      _
    %2214 = vsyncpa [#allocation3], 1
    %2215 = vsyncpa [#allocation6], 1
    %2216 = vsyncpa [#allocation9], 1
    %2217 = vsyncpa [#allocation4], 1

</llo_original>
